<compile_context>
chip_gen: v6e
topology: v6e:2x2x1
jax: 0.10.0
libtpu: 0.0.40
codegen_flags: <defaults>
</compile_context>

<pallas_src>
import jax
import jax.numpy as jnp
from jax.experimental import pallas as pl
from jax.experimental.pallas import tpu as pltpu

# Safe on all generations: > default scoped limit (16/32 MiB), < v7x physical
# 64 MiB per TensorCore.
_VMEM_LIMIT = 48 * 1024 * 1024


# ---------------------------------------------------------------------------
# Kernels
# ---------------------------------------------------------------------------

def _qkv_head_kernel(x_ref, wq_ref, wk_ref, wv_ref, q_ref, k_ref, v_ref):
    # x_ref:  (1, Tq, C) bf16
    # w*_ref: (1, C, Dh) bf16  (one head's columns; scale folded into wq)
    # outputs: (1, 1, Tq, Dh) bf16 in (B, H, N, Dh) layout -> head split fused.
    x = x_ref[0]
    q_ref[0, 0] = jnp.dot(x, wq_ref[0],
                          preferred_element_type=jnp.float32).astype(q_ref.dtype)
    k_ref[0, 0] = jnp.dot(x, wk_ref[0],
                          preferred_element_type=jnp.float32).astype(k_ref.dtype)
    v_ref[0, 0] = jnp.dot(x, wv_ref[0],
                          preferred_element_type=jnp.float32).astype(v_ref.dtype)


def _flash_attention_kernel(q_ref, k_ref, v_ref, o_ref, m_ref, l_ref, acc_ref):
    # q_ref: (1, Hb, Tq, Dh) bf16 (scale pre-folded into the QKV weight)
    # k_ref/v_ref: (1, Hb, Tkv, Dh) bf16
    # o_ref: (1, Hb, Tq, Dh) bf16
    # m_ref/l_ref: (Hb, Tq, 1) f32 scratch; acc_ref: (Hb, Tq, Dh) f32 scratch
    ki = pl.program_id(3)

    @pl.when(ki == 0)
    def _():
        m_ref[...] = jnp.full_like(m_ref, -jnp.inf)
        l_ref[...] = jnp.zeros_like(l_ref)
        acc_ref[...] = jnp.zeros_like(acc_ref)

    q = q_ref[0]                                   # (Hb, Tq, Dh) bf16
    k = k_ref[0]                                   # (Hb, Tkv, Dh) bf16
    v = v_ref[0]                                   # (Hb, Tkv, Dh) bf16

    # Batched scores over the head group (contract last dims, no transpose).
    s = jnp.einsum('hqd,hkd->hqk', q, k,
                   preferred_element_type=jnp.float32)   # (Hb, Tq, Tkv) f32

    m_prev = m_ref[...]
    m_new = jnp.maximum(m_prev, jnp.max(s, axis=-1, keepdims=True))
    alpha = jnp.exp(m_prev - m_new)                      # f32
    p = jnp.exp(s - m_new)                               # (Hb, Tq, Tkv) f32

    l_ref[...] = alpha * l_ref[...] + jnp.sum(p, axis=-1, keepdims=True)
    acc_ref[...] = alpha * acc_ref[...] + jnp.einsum(
        'hqk,hkd->hqd', p.astype(v.dtype), v,
        preferred_element_type=jnp.float32)
    m_ref[...] = m_new

    @pl.when(ki == pl.num_programs(3) - 1)
    def _():
        # approx reciprocal: ~2^-12 rel error, below bf16 output precision.
        inv_l = pl.reciprocal(l_ref[...], approx=True)
        o_ref[0] = (acc_ref[...] * inv_l).astype(o_ref.dtype)


def _merge_proj_kernel(a_ref, w_ref, b_ref, o_ref, acc_ref):
    # Fused head-merge + output projection: heads are a reduction grid axis.
    # a_ref: (1, 1, Tq, Dh) bf16 -- one head's rows of attn (B, H, N, Dh)
    # w_ref: (1, Dh, C) bf16     -- that head's rows of w_proj
    # b_ref: (1, C) f32
    # o_ref: (1, Tq, C); acc_ref: (Tq, C) f32 scratch
    h = pl.program_id(2)

    @pl.when(h == 0)
    def _():
        acc_ref[...] = jnp.zeros_like(acc_ref)

    acc_ref[...] += jnp.dot(a_ref[0, 0], w_ref[0],
                            preferred_element_type=jnp.float32)

    @pl.when(h == pl.num_programs(2) - 1)
    def _():
        o_ref[0] = (acc_ref[...] + b_ref[...]).astype(o_ref.dtype)


# ---------------------------------------------------------------------------
# Host-side weight preparation (done once; jit constants in production)
# ---------------------------------------------------------------------------

def prepare_attention_params(w_qkv, w_proj, b_proj, *, num_heads: int):
    C = w_qkv.shape[0]
    assert w_qkv.shape == (C, 3 * C)
    assert C % num_heads == 0, "dim should be divisible by num_heads"
    head_dim = C // num_heads
    scale = head_dim ** (-0.5)

    # Split QKV columns per head: (C, 3C) -> (C, 3, H, Dh) -> 3 x (H, C, Dh).
    w3 = w_qkv.reshape(C, 3, num_heads, head_dim)
    wq = jnp.transpose(w3[:, 0], (1, 0, 2)) * scale    # fold softmax scale (exact)
    wk = jnp.transpose(w3[:, 1], (1, 0, 2))
    wv = jnp.transpose(w3[:, 2], (1, 0, 2))
    # Proj weight split by head rows: (C, C) -> (H, Dh, C).
    wp = w_proj.reshape(num_heads, head_dim, C)

    return dict(
        wq=wq.astype(jnp.bfloat16),
        wk=wk.astype(jnp.bfloat16),
        wv=wv.astype(jnp.bfloat16),
        w_proj=wp.astype(jnp.bfloat16),
        bias=b_proj.reshape(1, C).astype(jnp.float32),
    )


def _pick_heads_per_step(num_heads, head_dim, tq, tkv,
                         budget_bytes=4 * 1024 * 1024):
    """Largest head-group per flash step whose intermediates stay modest."""
    best = 1
    for cand in range(1, num_heads + 1):
        if num_heads % cand:
            continue
        scores = cand * tq * tkv * 4                    # f32 s/p intermediates
        scratch = cand * tq * (head_dim + 2) * 4        # f32 acc + m + l
        tiles = cand * (tq + 2 * tkv) * head_dim * 2 * 2  # bf16 q/k/v, x2 buf
        if scores + scratch + tiles <= budget_bytes:
            best = cand
    return best


# ---------------------------------------------------------------------------
# Forward wrapper
# ---------------------------------------------------------------------------

def attention_forward(x, params, *, num_heads: int,
                      q_block: int = 256, kv_block: int = 256,
                      heads_per_step: int | None = None):
    """x: (B, N, C) -> (B, N, C).  Mirrors Attention.forward (eval mode)."""
    B, N, C = x.shape
    assert C % num_heads == 0, "dim should be divisible by num_heads"
    head_dim = C // num_heads

    tq = min(q_block, N)
    tkv = min(kv_block, N)
    # TODO(synk): ragged N (padding + score masking) is not implemented.
    assert N % tq == 0 and N % tkv == 0, "N must be divisible by the tile sizes"

    hb = heads_per_step or _pick_heads_per_step(num_heads, head_dim, tq, tkv)
    assert num_heads % hb == 0

    x_b = x.astype(jnp.bfloat16)
    wq, wk, wv = params["wq"], params["wk"], params["wv"]
    wp, bias = params["w_proj"], params["bias"]

    # ---- 1) QKV projection with fused head split --------------------------
    # grid (B, rows, H): H innermost so the x tile stays VMEM-resident across
    # heads; per-step weight block is only (C, Dh) (weight tiled by head).
    q, k, v = pl.pallas_call(
        _qkv_head_kernel,
        out_shape=tuple(
            jax.ShapeDtypeStruct((B, num_heads, N, head_dim), jnp.bfloat16)
            for _ in range(3)),
        grid_spec=pltpu.PrefetchScalarGridSpec(
            num_scalar_prefetch=0,
            grid=(B, N // tq, num_heads),
            in_specs=[
                pl.BlockSpec((1, tq, C), lambda b, i, h: (b, i, 0)),
                pl.BlockSpec((1, C, head_dim), lambda b, i, h: (h, 0, 0)),
                pl.BlockSpec((1, C, head_dim), lambda b, i, h: (h, 0, 0)),
                pl.BlockSpec((1, C, head_dim), lambda b, i, h: (h, 0, 0)),
            ],
            out_specs=[
                pl.BlockSpec((1, 1, tq, head_dim), lambda b, i, h: (b, h, i, 0)),
                pl.BlockSpec((1, 1, tq, head_dim), lambda b, i, h: (b, h, i, 0)),
                pl.BlockSpec((1, 1, tq, head_dim), lambda b, i, h: (b, h, i, 0)),
            ],
        ),
        compiler_params=pltpu.CompilerParams(
            dimension_semantics=("parallel", "parallel", "parallel"),
            vmem_limit_bytes=_VMEM_LIMIT),
    )(x_b, wq, wk, wv)

    # ---- 2) Flash attention, heads batched per grid step -------------------
    attn = pl.pallas_call(
        _flash_attention_kernel,
        out_shape=jax.ShapeDtypeStruct((B, num_heads, N, head_dim),
                                       jnp.bfloat16),
        grid_spec=pltpu.PrefetchScalarGridSpec(
            num_scalar_prefetch=0,
            grid=(B, num_heads // hb, N // tq, N // tkv),
            in_specs=[
                pl.BlockSpec((1, hb, tq, head_dim),
                             lambda b, h, qi, ki: (b, h, qi, 0)),
                pl.BlockSpec((1, hb, tkv, head_dim),
                             lambda b, h, qi, ki: (b, h, ki, 0)),
                pl.BlockSpec((1, hb, tkv, head_dim),
                             lambda b, h, qi, ki: (b, h, ki, 0)),
            ],
            out_specs=pl.BlockSpec((1, hb, tq, head_dim),
                                   lambda b, h, qi, ki: (b, h, qi, 0)),
            scratch_shapes=[
                pltpu.VMEM((hb, tq, 1), jnp.float32),          # running max m
                pltpu.VMEM((hb, tq, 1), jnp.float32),          # running sum l
                pltpu.VMEM((hb, tq, head_dim), jnp.float32),   # accumulator
            ],
        ),
        compiler_params=pltpu.CompilerParams(
            dimension_semantics=("parallel", "parallel", "parallel",
                                 "arbitrary"),
            vmem_limit_bytes=_VMEM_LIMIT),
    )(q, k, v)

    # ---- 3) Fused head merge + output projection + bias ---------------------
    # Heads are the (innermost, "arbitrary") reduction axis; the (B, N, C)
    # output tile stays resident as an f32 accumulator across heads.
    out = pl.pallas_call(
        _merge_proj_kernel,
        out_shape=jax.ShapeDtypeStruct((B, N, C), x.dtype),
        grid_spec=pltpu.PrefetchScalarGridSpec(
            num_scalar_prefetch=0,
            grid=(B, N // tq, num_heads),
            in_specs=[
                pl.BlockSpec((1, 1, tq, head_dim), lambda b, i, h: (b, h, i, 0)),
                pl.BlockSpec((1, head_dim, C), lambda b, i, h: (h, 0, 0)),
                pl.BlockSpec((1, C), lambda b, i, h: (0, 0)),
            ],
            out_specs=pl.BlockSpec((1, tq, C), lambda b, i, h: (b, i, 0)),
            scratch_shapes=[pltpu.VMEM((tq, C), jnp.float32)],
        ),
        compiler_params=pltpu.CompilerParams(
            dimension_semantics=("parallel", "parallel", "arbitrary"),
            vmem_limit_bytes=_VMEM_LIMIT),
    )(attn, wp, bias)

    return out


# ---------------------------------------------------------------------------
# Pure-JAX reference (f32) mirroring the PyTorch forward
# ---------------------------------------------------------------------------

def attention_reference(x, w_qkv, w_proj, b_proj, *, num_heads: int):
    B, N, C = x.shape
    head_dim = C // num_heads
    scale = head_dim ** (-0.5)
    qkv = x @ w_qkv                                       # (B, N, 3C)
    qkv = qkv.reshape(B, N, 3, num_heads, head_dim)
    q, k, v = qkv[:, :, 0], qkv[:, :, 1], qkv[:, :, 2]    # (B, N, H, Dh)
    q = jnp.transpose(q, (0, 2, 1, 3))                    # (B, H, N, Dh)
    k = jnp.transpose(k, (0, 2, 1, 3))
    v = jnp.transpose(v, (0, 2, 1, 3))
    s = jnp.einsum('bhnd,bhmd->bhnm', q, k) * scale
    p = jax.nn.softmax(s, axis=-1)
    o = jnp.einsum('bhnm,bhmd->bhnd', p, v)               # (B, H, N, Dh)
    o = jnp.transpose(o, (0, 2, 1, 3)).reshape(B, N, C)
    return o @ w_proj + b_proj


# TODO(synk): rope / qk_norm / dropout branches are inactive with the module
# defaults (rope=None, qk_norm=False, eval mode) and are not implemented.

if __name__ == "__main__":
    # Small shapes consistent with the module: x is (B, N, C).  N=512 with
    # 256-wide tiles exercises the online-softmax KV loop (2 KV blocks) and
    # the per-head reduction of the fused merge+proj kernel (2 heads).
    B, N, C = 2, 512, 256
    num_heads = 2          # head_dim = 128 (lane-dense)

    key = jax.random.PRNGKey(0)
    kx, kqkv, kproj, kb = jax.random.split(key, 4)

    x = jax.random.normal(kx, (B, N, C), dtype=jnp.float32)
    w_qkv = jax.random.normal(kqkv, (C, 3 * C), dtype=jnp.float32) * 0.02
    w_proj = jax.random.normal(kproj, (C, C), dtype=jnp.float32) * 0.02
    b_proj = jax.random.normal(kb, (C,), dtype=jnp.float32) * 0.02

    params = prepare_attention_params(w_qkv, w_proj, b_proj,
                                      num_heads=num_heads)
    out = attention_forward(x, params, num_heads=num_heads)
    out = jax.block_until_ready(out)

    ref = attention_reference(x, w_qkv, w_proj, b_proj, num_heads=num_heads)
    assert out.shape == (B, N, C)
    max_err = float(jnp.max(jnp.abs(out.astype(jnp.float32) - ref)))
    # bf16 MXU operands with f32 accumulation -> loosened tolerance.
    assert jnp.allclose(out.astype(jnp.float32), ref, atol=2e-2, rtol=2e-2), max_err

    print("KERNEL_OK")
</pallas_src>

<mosaic_0001>
module attributes {stable_mosaic.version = 11 : i64} {
  func.func @_qkv_head_kernel(%arg0: i32, %arg1: i32, %arg2: i32, %arg3: memref<1x256x256xbf16, #tpu.memory_space<vmem>>, %arg4: memref<1x256x128xbf16, #tpu.memory_space<vmem>>, %arg5: memref<1x256x128xbf16, #tpu.memory_space<vmem>>, %arg6: memref<1x256x128xbf16, #tpu.memory_space<vmem>>, %arg7: memref<1x1x256x128xbf16, #tpu.memory_space<vmem>>, %arg8: memref<1x1x256x128xbf16, #tpu.memory_space<vmem>>, %arg9: memref<1x1x256x128xbf16, #tpu.memory_space<vmem>>) attributes {dimension_semantics = [#tpu.dimension_semantics<parallel>, #tpu.dimension_semantics<parallel>, #tpu.dimension_semantics<parallel>], iteration_bounds = array<i64: 2, 2, 2>, scalar_prefetch = 0 : i64, scratch_operands = 0 : i64, tpu.core_type = #tpu.core_type<tc>, window_params = [{transform_indices = @transform_0, window_bounds = array<i64: 1, 256, 256>}, {transform_indices = @transform_1, window_bounds = array<i64: 1, 256, 128>}, {transform_indices = @transform_2, window_bounds = array<i64: 1, 256, 128>}, {transform_indices = @transform_3, window_bounds = array<i64: 1, 256, 128>}, {transform_indices = @transform_4, window_bounds = array<i64: 1, 1, 256, 128>}, {transform_indices = @transform_5, window_bounds = array<i64: 1, 1, 256, 128>}, {transform_indices = @transform_6, window_bounds = array<i64: 1, 1, 256, 128>}]} {
    %c0 = arith.constant 0 : index
    %c0_0 = arith.constant 0 : index
    %c0_1 = arith.constant 0 : index
    %0 = vector.load %arg3[%c0, %c0_0, %c0_1] : memref<1x256x256xbf16, #tpu.memory_space<vmem>>, vector<1x256x256xbf16>
    %1 = vector.shape_cast %0 : vector<1x256x256xbf16> to vector<256x256xbf16>
    %c0_2 = arith.constant 0 : index
    %c0_3 = arith.constant 0 : index
    %c0_4 = arith.constant 0 : index
    %2 = vector.load %arg4[%c0_2, %c0_3, %c0_4] : memref<1x256x128xbf16, #tpu.memory_space<vmem>>, vector<1x256x128xbf16>
    %3 = vector.shape_cast %2 : vector<1x256x128xbf16> to vector<256x128xbf16>
    %cst = arith.constant dense<0.000000e+00> : vector<256x128xf32>
    %4 = tpu.matmul %1, %3, %cst {dimension_numbers = #tpu.dot_dimension_numbers<[1], [0], [0], [1], [0, 0, 1, 1], [], []>} : vector<256x256xbf16>, vector<256x128xbf16>, vector<256x128xf32> -> vector<256x128xf32>
    %5 = arith.truncf %4 : vector<256x128xf32> to vector<256x128xbf16>
    %c0_5 = arith.constant 0 : index
    %c0_6 = arith.constant 0 : index
    %c0_7 = arith.constant 0 : index
    %c0_8 = arith.constant 0 : index
    %6 = vector.load %arg7[%c0_5, %c0_6, %c0_7, %c0_8] : memref<1x1x256x128xbf16, #tpu.memory_space<vmem>>, vector<1x1x256x128xbf16>
    %7 = vector.shape_cast %6 : vector<1x1x256x128xbf16> to vector<256x128xbf16>
    %8 = vector.shape_cast %5 : vector<256x128xbf16> to vector<1x1x256x128xbf16>
    tpu.vector_store %arg7[%c0_5, %c0_6, %c0_7, %c0_8], %8 {strides = array<i32>} : memref<1x1x256x128xbf16, #tpu.memory_space<vmem>>, vector<1x1x256x128xbf16>,
    %c0_9 = arith.constant 0 : index
    %c0_10 = arith.constant 0 : index
    %c0_11 = arith.constant 0 : index
    %9 = vector.load %arg5[%c0_9, %c0_10, %c0_11] : memref<1x256x128xbf16, #tpu.memory_space<vmem>>, vector<1x256x128xbf16>
    %10 = vector.shape_cast %9 : vector<1x256x128xbf16> to vector<256x128xbf16>
    %cst_12 = arith.constant dense<0.000000e+00> : vector<256x128xf32>
    %11 = tpu.matmul %1, %10, %cst_12 {dimension_numbers = #tpu.dot_dimension_numbers<[1], [0], [0], [1], [0, 0, 1, 1], [], []>} : vector<256x256xbf16>, vector<256x128xbf16>, vector<256x128xf32> -> vector<256x128xf32>
    %12 = arith.truncf %11 : vector<256x128xf32> to vector<256x128xbf16>
    %c0_13 = arith.constant 0 : index
    %c0_14 = arith.constant 0 : index
    %c0_15 = arith.constant 0 : index
    %c0_16 = arith.constant 0 : index
    %13 = vector.load %arg8[%c0_13, %c0_14, %c0_15, %c0_16] : memref<1x1x256x128xbf16, #tpu.memory_space<vmem>>, vector<1x1x256x128xbf16>
    %14 = vector.shape_cast %13 : vector<1x1x256x128xbf16> to vector<256x128xbf16>
    %15 = vector.shape_cast %12 : vector<256x128xbf16> to vector<1x1x256x128xbf16>
    tpu.vector_store %arg8[%c0_13, %c0_14, %c0_15, %c0_16], %15 {strides = array<i32>} : memref<1x1x256x128xbf16, #tpu.memory_space<vmem>>, vector<1x1x256x128xbf16>,
    %c0_17 = arith.constant 0 : index
    %c0_18 = arith.constant 0 : index
    %c0_19 = arith.constant 0 : index
    %16 = vector.load %arg6[%c0_17, %c0_18, %c0_19] : memref<1x256x128xbf16, #tpu.memory_space<vmem>>, vector<1x256x128xbf16>
    %17 = vector.shape_cast %16 : vector<1x256x128xbf16> to vector<256x128xbf16>
    %cst_20 = arith.constant dense<0.000000e+00> : vector<256x128xf32>
    %18 = tpu.matmul %1, %17, %cst_20 {dimension_numbers = #tpu.dot_dimension_numbers<[1], [0], [0], [1], [0, 0, 1, 1], [], []>} : vector<256x256xbf16>, vector<256x128xbf16>, vector<256x128xf32> -> vector<256x128xf32>
    %19 = arith.truncf %18 : vector<256x128xf32> to vector<256x128xbf16>
    %c0_21 = arith.constant 0 : index
    %c0_22 = arith.constant 0 : index
    %c0_23 = arith.constant 0 : index
    %c0_24 = arith.constant 0 : index
    %20 = vector.load %arg9[%c0_21, %c0_22, %c0_23, %c0_24] : memref<1x1x256x128xbf16, #tpu.memory_space<vmem>>, vector<1x1x256x128xbf16>
    %21 = vector.shape_cast %20 : vector<1x1x256x128xbf16> to vector<256x128xbf16>
    %22 = vector.shape_cast %19 : vector<256x128xbf16> to vector<1x1x256x128xbf16>
    tpu.vector_store %arg9[%c0_21, %c0_22, %c0_23, %c0_24], %22 {strides = array<i32>} : memref<1x1x256x128xbf16, #tpu.memory_space<vmem>>, vector<1x1x256x128xbf16>,
    return
  }
  func.func @transform_0(%arg0: i32, %arg1: i32, %arg2: i32) -> (i32, i32, i32) {
    %c0_i32 = arith.constant 0 : i32
    %c0_i32_0 = arith.constant 0 : i32
    return %arg0, %arg1, %c0_i32 : i32, i32, i32
  }
  func.func @transform_1(%arg0: i32, %arg1: i32, %arg2: i32) -> (i32, i32, i32) {
    %c0_i32 = arith.constant 0 : i32
    %c0_i32_0 = arith.constant 0 : i32
    %c0_i32_1 = arith.constant 0 : i32
    return %arg2, %c0_i32, %c0_i32_0 : i32, i32, i32
  }
  func.func @transform_2(%arg0: i32, %arg1: i32, %arg2: i32) -> (i32, i32, i32) {
    %c0_i32 = arith.constant 0 : i32
    %c0_i32_0 = arith.constant 0 : i32
    %c0_i32_1 = arith.constant 0 : i32
    return %arg2, %c0_i32, %c0_i32_0 : i32, i32, i32
  }
  func.func @transform_3(%arg0: i32, %arg1: i32, %arg2: i32) -> (i32, i32, i32) {
    %c0_i32 = arith.constant 0 : i32
    %c0_i32_0 = arith.constant 0 : i32
    %c0_i32_1 = arith.constant 0 : i32
    return %arg2, %c0_i32, %c0_i32_0 : i32, i32, i32
  }
  func.func @transform_4(%arg0: i32, %arg1: i32, %arg2: i32) -> (i32, i32, i32, i32) {
    %c0_i32 = arith.constant 0 : i32
    %c0_i32_0 = arith.constant 0 : i32
    return %arg0, %arg2, %arg1, %c0_i32 : i32, i32, i32, i32
  }
  func.func @transform_5(%arg0: i32, %arg1: i32, %arg2: i32) -> (i32, i32, i32, i32) {
    %c0_i32 = arith.constant 0 : i32
    %c0_i32_0 = arith.constant 0 : i32
    return %arg0, %arg2, %arg1, %c0_i32 : i32, i32, i32, i32
  }
  func.func @transform_6(%arg0: i32, %arg1: i32, %arg2: i32) -> (i32, i32, i32, i32) {
    %c0_i32 = arith.constant 0 : i32
    %c0_i32_0 = arith.constant 0 : i32
    return %arg0, %arg2, %arg1, %c0_i32 : i32, i32, i32, i32
  }
}

</mosaic_0001>

<llo_original>
// kernel: tpu_custom_call.1
$region0: #{tpu_custom_call.1}
  #allocation0 [shape = 'u32[]', space=smem, size = 0x4, offset = 0x4, fixed_abs, tag = 'smem constant byte address 0x4 - core index']
  #allocation1 [shape = 'u32[144,128]{1,0:T(1,128)}', space=vmem, size = 0x12000, scoped, tag = 'internal scratch']
  %s0 = inlined_call_operand.hbm [shape: bf16[2,512,256], index: 0, kind: input, shape index: {}]
  %s1 = inlined_call_operand.hbm [shape: bf16[2,256,128], index: 1, kind: input, shape index: {}]
  %s2 = inlined_call_operand.hbm [shape: bf16[2,256,128], index: 2, kind: input, shape index: {}]
  %s3 = inlined_call_operand.hbm [shape: bf16[2,256,128], index: 3, kind: input, shape index: {}]
  %s4 = inlined_call_operand.hbm [shape: bf16[2,2,512,128], index: 4, kind: output, shape index: {0}]
  %s5 = inlined_call_operand.hbm [shape: bf16[2,2,512,128], index: 5, kind: output, shape index: {1}]
  %s6 = inlined_call_operand.hbm [shape: bf16[2,2,512,128], index: 6, kind: output, shape index: {2}]
  %7 = xla_tuple %s4, %s5, %s6
  %s8 = sld [smem:[#allocation0]]
  $region81: #{tpu_custom_call.1} parent=0
    _
  %s10 = ssub.s32 1, %s8
  %s11 = scalar_select 0, %s10, %s8
  $region1: #{tpu_custom_call.1} parent=0
    #allocation2 [shape = 'u8[262144]{0}', space=vmem, size = 0x40000, scoped, tag = 'input window, operand 0']
    #allocation3 [shape = 's32[2]{0}', space=sflag, size = 0x8, scoped, tag = 'scoped memory for tpu_custom_call.1']
    #allocation4 [shape = 's32[2]{0}', space=sflag, size = 0x8, scoped, tag = 'scoped memory for tpu_custom_call.1']
    #allocation5 [shape = 'u8[131072]{0}', space=vmem, size = 0x20000, scoped, tag = 'input window, operand 1']
    #allocation6 [shape = 's32[2]{0}', space=sflag, size = 0x8, scoped, tag = 'scoped memory for tpu_custom_call.1']
    #allocation7 [shape = 'u8[131072]{0}', space=vmem, size = 0x20000, scoped, tag = 'input window, operand 2']
    #allocation8 [shape = 'u8[131072]{0}', space=vmem, size = 0x20000, scoped, tag = 'input window, operand 3']
    #allocation9 [shape = 's32[2]{0}', space=sflag, size = 0x8, scoped, tag = 'scoped memory for tpu_custom_call.1']
    #allocation10 [shape = 'u8[131072]{0}', space=vmem, size = 0x20000, scoped, tag = 'output window, operand 0']
    #allocation11 [shape = 'u8[131072]{0}', space=vmem, size = 0x20000, scoped, tag = 'output window, operand 1']
    #allocation12 [shape = 's32[2]{0}', space=sflag, size = 0x8, scoped, tag = 'scoped memory for tpu_custom_call.1']
    #allocation13 [shape = 'u8[131072]{0}', space=vmem, size = 0x20000, scoped, tag = 'output window, operand 2']
    %12 = vsyncpa [#allocation3], 0
    %s13 = scalar_lea.sflag [#allocation3], 1
    %14 = vsyncpa %s13, 0
    %15 = vsyncpa [#allocation6], 0
    %s16 = scalar_lea.sflag [#allocation6], 1
    %17 = vsyncpa %s16, 0
    %18 = vsyncpa [#allocation9], 0
    %s19 = scalar_lea.sflag [#allocation9], 1
    %20 = vsyncpa %s19, 0
    %21 = vsyncpa [#allocation4], 0
    %s22 = scalar_lea.sflag [#allocation4], 1
    %23 = vsyncpa %s22, 0
    %24 = vsyncpa [#allocation12], 0
    %s25 = scalar_lea.sflag [#allocation12], 1
    %26 = vsyncpa %s25, 0
    loop: start=0, step=1, limit=10
    $region2: #{tpu_custom_call.1} parent=1 // loop_pre_header
      _
    $region3: #{tpu_custom_call.1} parent=1 // loop_header
      %s28 = sphi 0, %s32
      %p29 = scmp.ge.s32.totalorder %s28, 10
      %s35 = sphi 0, %s54
      %s36 = sphi 0, %s50
      %s37 = sphi 0, %s46
      %s38 = sphi 0, %s35
      %s39 = sphi 0, %s36
      %s40 = sphi 0, %s37
      %s41 = sphi 0, %s38
      %s42 = sphi 0, %s39
      %s43 = sphi 0, %s40
      %s59 = sphi 0, %s61
      %s62 = sphi 0, %s59
      %s63 = sphi 0, %s62
      %s79 = sphi 0, %s63
      %s85 = sphi 0, %s87
      %s88 = sphi 0, %s85
      %s89 = sphi 0, %s88
      %s105 = sphi 0, %s89
      %s111 = sphi 0, %s113
      %s114 = sphi 0, %s111
      %s115 = sphi 0, %s114
      %s131 = sphi 0, %s115
      %s137 = sphi 0, %s139
      %s140 = sphi 0, %s137
      %s141 = sphi 0, %s140
      %s157 = sphi 0, %s141
      %s167 = sphi 0, %s169
      %s170 = sphi 0, %s167
      %s171 = sphi 0, %s170
      %s187 = sphi 0, %s171
      %s197 = sphi 0, %s199
      %s200 = sphi 0, %s197
      %s201 = sphi 0, %s200
      %s217 = sphi 0, %s201
      %s227 = sphi 0, %s229
      %s230 = sphi 0, %s227
      %s231 = sphi 0, %s230
      %s247 = sphi 0, %s231
    $region4: #{tpu_custom_call.1} parent=1 // loop_header_branch
      %31 = sbr.rel (%p29) target = $region8
    $region5: #{tpu_custom_call.1} parent=1 // loop_body
      %s33 = ssub.s32 %s28, 1
      %s34 = ssub.s32 %s28, 2
      %s44 = sadd.s32 1, %s37
      %p45 = scmp.ge.s32.totalorder %s44, 2
      %s46 = scalar_select %p45, 0, %s44
      %s47 = sadd.s32 1, %s36
      %s48 = scalar_select %p45, %s47, %s36
      %p49 = scmp.ge.s32.totalorder %s48, 2
      %s50 = scalar_select %p49, 0, %s48
      %s51 = sadd.s32 1, %s35
      %s52 = scalar_select %p49, %s51, %s35
      %p53 = scmp.ge.s32.totalorder %s52, 2
      %s54 = scalar_select %p53, 0, %s52
      %s55 = ssub.s32 %s35, %s54
      %s56 = ssub.s32 %s36, %s50
      %s57 = sor.u32 %s55, %s56
      %p58 = scmp.eq.s32.totalorder %s57, 0
      %s60 = sadd.s32 %s59, 1
      %s61 = scalar_select %p58, %s59, %s60
      %p64 = pneg %p58
      %p65 = scmp.eq.s32.totalorder %s28, 7
      %p66 = por %p64, %p65
      %p67 = scmp.ne.s32.totalorder %s59, %s62
      %p68 = scmp.eq.s32.totalorder %s28, 0
      %p69 = por %p67, %p68
      %p70 = scmp.ne.s32.totalorder %s59, %s62
      %p71 = scmp.eq.s32.totalorder %s33, 7
      %p72 = por %p70, %p71
      %p73 = scmp.ne.s32.totalorder %s62, %s63
      %p74 = scmp.eq.s32.totalorder %s33, 0
      %p75 = por %p73, %p74
      %p76 = scmp.ne.s32.totalorder %s62, %s63
      %p77 = scmp.eq.s32.totalorder %s34, 7
      %p78 = por %p76, %p77
      %p80 = scmp.ne.s32.totalorder %s63, %s79
      %p81 = scmp.eq.s32.totalorder %s34, 0
      %p82 = por %p80, %p81
      %s83 = ssub.s32 %s37, %s46
      %p84 = scmp.eq.s32.totalorder %s83, 0
      %s86 = sadd.s32 %s85, 1
      %s87 = scalar_select %p84, %s85, %s86
      %p90 = pneg %p84
      %p91 = scmp.eq.s32.totalorder %s28, 7
      %p92 = por %p90, %p91
      %p93 = scmp.ne.s32.totalorder %s85, %s88
      %p94 = scmp.eq.s32.totalorder %s28, 0
      %p95 = por %p93, %p94
      %p96 = scmp.ne.s32.totalorder %s85, %s88
      %p97 = scmp.eq.s32.totalorder %s33, 7
      %p98 = por %p96, %p97
      %p99 = scmp.ne.s32.totalorder %s88, %s89
      %p100 = scmp.eq.s32.totalorder %s33, 0
      %p101 = por %p99, %p100
      %p102 = scmp.ne.s32.totalorder %s88, %s89
      %p103 = scmp.eq.s32.totalorder %s34, 7
      %p104 = por %p102, %p103
      %p106 = scmp.ne.s32.totalorder %s89, %s105
      %p107 = scmp.eq.s32.totalorder %s34, 0
      %p108 = por %p106, %p107
      %s109 = ssub.s32 %s37, %s46
      %p110 = scmp.eq.s32.totalorder %s109, 0
      %s112 = sadd.s32 %s111, 1
      %s113 = scalar_select %p110, %s111, %s112
      %p116 = pneg %p110
      %p117 = scmp.eq.s32.totalorder %s28, 7
      %p118 = por %p116, %p117
      %p119 = scmp.ne.s32.totalorder %s111, %s114
      %p120 = scmp.eq.s32.totalorder %s28, 0
      %p121 = por %p119, %p120
      %p122 = scmp.ne.s32.totalorder %s111, %s114
      %p123 = scmp.eq.s32.totalorder %s33, 7
      %p124 = por %p122, %p123
      %p125 = scmp.ne.s32.totalorder %s114, %s115
      %p126 = scmp.eq.s32.totalorder %s33, 0
      %p127 = por %p125, %p126
      %p128 = scmp.ne.s32.totalorder %s114, %s115
      %p129 = scmp.eq.s32.totalorder %s34, 7
      %p130 = por %p128, %p129
      %p132 = scmp.ne.s32.totalorder %s115, %s131
      %p133 = scmp.eq.s32.totalorder %s34, 0
      %p134 = por %p132, %p133
      %s135 = ssub.s32 %s37, %s46
      %p136 = scmp.eq.s32.totalorder %s135, 0
      %s138 = sadd.s32 %s137, 1
      %s139 = scalar_select %p136, %s137, %s138
      %p142 = pneg %p136
      %p143 = scmp.eq.s32.totalorder %s28, 7
      %p144 = por %p142, %p143
      %p145 = scmp.ne.s32.totalorder %s137, %s140
      %p146 = scmp.eq.s32.totalorder %s28, 0
      %p147 = por %p145, %p146
      %p148 = scmp.ne.s32.totalorder %s137, %s140
      %p149 = scmp.eq.s32.totalorder %s33, 7
      %p150 = por %p148, %p149
      %p151 = scmp.ne.s32.totalorder %s140, %s141
      %p152 = scmp.eq.s32.totalorder %s33, 0
      %p153 = por %p151, %p152
      %p154 = scmp.ne.s32.totalorder %s140, %s141
      %p155 = scmp.eq.s32.totalorder %s34, 7
      %p156 = por %p154, %p155
      %p158 = scmp.ne.s32.totalorder %s141, %s157
      %p159 = scmp.eq.s32.totalorder %s34, 0
      %p160 = por %p158, %p159
      %s161 = ssub.s32 %s35, %s54
      %s162 = ssub.s32 %s37, %s46
      %s163 = sor.u32 %s161, %s162
      %s164 = ssub.s32 %s36, %s50
      %s165 = sor.u32 %s163, %s164
      %p166 = scmp.eq.s32.totalorder %s165, 0
      %s168 = sadd.s32 %s167, 1
      %s169 = scalar_select %p166, %s167, %s168
      %p172 = pneg %p166
      %p173 = scmp.eq.s32.totalorder %s28, 7
      %p174 = por %p172, %p173
      %p175 = scmp.ne.s32.totalorder %s167, %s170
      %p176 = scmp.eq.s32.totalorder %s28, 0
      %p177 = por %p175, %p176
      %p178 = scmp.ne.s32.totalorder %s167, %s170
      %p179 = scmp.eq.s32.totalorder %s33, 7
      %p180 = por %p178, %p179
      %p181 = scmp.ne.s32.totalorder %s170, %s171
      %p182 = scmp.eq.s32.totalorder %s33, 0
      %p183 = por %p181, %p182
      %p184 = scmp.ne.s32.totalorder %s170, %s171
      %p185 = scmp.eq.s32.totalorder %s34, 7
      %p186 = por %p184, %p185
      %p188 = scmp.ne.s32.totalorder %s171, %s187
      %p189 = scmp.eq.s32.totalorder %s34, 0
      %p190 = por %p188, %p189
      %s191 = ssub.s32 %s35, %s54
      %s192 = ssub.s32 %s37, %s46
      %s193 = sor.u32 %s191, %s192
      %s194 = ssub.s32 %s36, %s50
      %s195 = sor.u32 %s193, %s194
      %p196 = scmp.eq.s32.totalorder %s195, 0
      %s198 = sadd.s32 %s197, 1
      %s199 = scalar_select %p196, %s197, %s198
      %p202 = pneg %p196
      %p203 = scmp.eq.s32.totalorder %s28, 7
      %p204 = por %p202, %p203
      %p205 = scmp.ne.s32.totalorder %s197, %s200
      %p206 = scmp.eq.s32.totalorder %s28, 0
      %p207 = por %p205, %p206
      %p208 = scmp.ne.s32.totalorder %s197, %s200
      %p209 = scmp.eq.s32.totalorder %s33, 7
      %p210 = por %p208, %p209
      %p211 = scmp.ne.s32.totalorder %s200, %s201
      %p212 = scmp.eq.s32.totalorder %s33, 0
      %p213 = por %p211, %p212
      %p214 = scmp.ne.s32.totalorder %s200, %s201
      %p215 = scmp.eq.s32.totalorder %s34, 7
      %p216 = por %p214, %p215
      %p218 = scmp.ne.s32.totalorder %s201, %s217
      %p219 = scmp.eq.s32.totalorder %s34, 0
      %p220 = por %p218, %p219
      %s221 = ssub.s32 %s35, %s54
      %s222 = ssub.s32 %s37, %s46
      %s223 = sor.u32 %s221, %s222
      %s224 = ssub.s32 %s36, %s50
      %s225 = sor.u32 %s223, %s224
      %p226 = scmp.eq.s32.totalorder %s225, 0
      %s228 = sadd.s32 %s227, 1
      %s229 = scalar_select %p226, %s227, %s228
      %p232 = pneg %p226
      %p233 = scmp.eq.s32.totalorder %s28, 7
      %p234 = por %p232, %p233
      %p235 = scmp.ne.s32.totalorder %s227, %s230
      %p236 = scmp.eq.s32.totalorder %s28, 0
      %p237 = por %p235, %p236
      %p238 = scmp.ne.s32.totalorder %s227, %s230
      %p239 = scmp.eq.s32.totalorder %s33, 7
      %p240 = por %p238, %p239
      %p241 = scmp.ne.s32.totalorder %s230, %s231
      %p242 = scmp.eq.s32.totalorder %s33, 0
      %p243 = por %p241, %p242
      %p244 = scmp.ne.s32.totalorder %s230, %s231
      %p245 = scmp.eq.s32.totalorder %s34, 7
      %p246 = por %p244, %p245
      %p248 = scmp.ne.s32.totalorder %s231, %s247
      %p249 = scmp.eq.s32.totalorder %s34, 0
      %p250 = por %p248, %p249
      %p251 = scmp.le.s32.totalorder 1, %s28
      %p252 = scmp.lt.s32.totalorder %s28, 9
      %p253 = pnand %p251, %p252
      %p254 = pneg %p253
      // Predicated region
      $region9: #{tpu_custom_call.1} parent=5 // pred_check
        _
      $region10: #{tpu_custom_call.1} parent=5 // pred_check_branch
        %256 = sbr.rel (%p253) target = $region12
      $region11: #{tpu_custom_call.1} parent=5 // pred_region
        %s257 = ssub.s32 %s28, 1
      $region12: #{tpu_custom_call.1} parent=5 // pred_fallthru
        _
      %p258 = scmp.lt.s32.totalorder %s28, 8
      // Predicated region
      $region13: #{tpu_custom_call.1} parent=5 // pred_check
        %p259 = pneg %p258
      $region14: #{tpu_custom_call.1} parent=5 // pred_check_branch
        %261 = sbr.rel (%p259) target = $region16
      $region15: #{tpu_custom_call.1} parent=5 // pred_region
        // Predicated region
        $region17: #{tpu_custom_call.1} parent=15 // pred_check
          %p262 = pneg %p69
        $region18: #{tpu_custom_call.1} parent=15 // pred_check_branch
          %264 = sbr.rel (%p262) target = $region20
        $region19: #{tpu_custom_call.1} parent=15 // pred_region
          %s265 = sand.u32 %s59, 1
          %s266 = scalar_lea.sflag [#allocation3], %s265
          %s267 = sand.u32 %s59, 1
          %s268 = smul.addr %s267, 256
          %s269 = scalar_lea.vmem [#allocation2], %s268
          %s270 = smul.u32 32, %s36
          %s272 = ssub.s32 4096, 4096
          %273 = vsyncadd %s266, %s272
          %s274 = smul.addr %s270, 2
          %s275 = smul.addr %s35, 128
          %s276 = sadd.s32 %s274, %s275
          %s277 = smul.addr %s276, 64
          %s278 = scalar_lea.hbm %s0, %s277
          %s279 = sshll.u32 %s269, 4
          %s280 = int_to_ptr.vmem [resolvable:$true] %s279
          %285 = dma.hbm_to_vmem [thread:$0]  %s278, 4096, %s280, %s266, 128, 128, 8
        $region20: #{tpu_custom_call.1} parent=15 // pred_fallthru
          _
        // Predicated region
        $region21: #{tpu_custom_call.1} parent=15 // pred_check
          %p286 = pneg %p95
        $region22: #{tpu_custom_call.1} parent=15 // pred_check_branch
          %288 = sbr.rel (%p286) target = $region24
        $region23: #{tpu_custom_call.1} parent=15 // pred_region
          %s289 = sand.u32 %s28, 1
          %s290 = scalar_lea.sflag [#allocation6], %s289
          %s291 = sand.u32 %s85, 1
          %s292 = smul.addr %s291, 128
          %s293 = scalar_lea.vmem [#allocation5], %s292
          %s295 = ssub.s32 2048, 2048
          %296 = vsyncadd %s290, %s295
          %s297 = smul.addr %s37, 32
          %s298 = smul.addr %s297, 64
          %s299 = scalar_lea.hbm %s1, %s298
          %s300 = sshll.u32 %s293, 4
          %s301 = int_to_ptr.vmem [resolvable:$true] %s300
          %306 = dma.hbm_to_vmem [thread:$0]  %s299, 2048, %s301, %s290, 64, 64, 4
        $region24: #{tpu_custom_call.1} parent=15 // pred_fallthru
          _
        // Predicated region
        $region25: #{tpu_custom_call.1} parent=15 // pred_check
          %p307 = pneg %p121
        $region26: #{tpu_custom_call.1} parent=15 // pred_check_branch
          %309 = sbr.rel (%p307) target = $region28
        $region27: #{tpu_custom_call.1} parent=15 // pred_region
          %s310 = sand.u32 %s28, 1
          %s311 = scalar_lea.sflag [#allocation6], %s310
          %s312 = sand.u32 %s111, 1
          %s313 = smul.addr %s312, 128
          %s314 = scalar_lea.vmem [#allocation7], %s313
          %s316 = ssub.s32 2048, 2048
          %317 = vsyncadd %s311, %s316
          %s318 = smul.addr %s37, 32
          %s319 = smul.addr %s318, 64
          %s320 = scalar_lea.hbm %s2, %s319
          %s321 = sshll.u32 %s314, 4
          %s322 = int_to_ptr.vmem [resolvable:$true] %s321
          %327 = dma.hbm_to_vmem [thread:$0]  %s320, 2048, %s322, %s311, 64, 64, 4
        $region28: #{tpu_custom_call.1} parent=15 // pred_fallthru
          _
        // Predicated region
        $region29: #{tpu_custom_call.1} parent=15 // pred_check
          %p328 = pneg %p147
        $region30: #{tpu_custom_call.1} parent=15 // pred_check_branch
          %330 = sbr.rel (%p328) target = $region32
        $region31: #{tpu_custom_call.1} parent=15 // pred_region
          %s331 = sand.u32 %s137, 1
          %s332 = scalar_lea.sflag [#allocation9], %s331
          %s333 = sand.u32 %s137, 1
          %s334 = smul.addr %s333, 128
          %s335 = scalar_lea.vmem [#allocation8], %s334
          %s337 = ssub.s32 2048, 2048
          %338 = vsyncadd %s332, %s337
          %s339 = smul.addr %s37, 32
          %s340 = smul.addr %s339, 64
          %s341 = scalar_lea.hbm %s3, %s340
          %s342 = sshll.u32 %s335, 4
          %s343 = int_to_ptr.vmem [resolvable:$true] %s342
          %348 = dma.hbm_to_vmem [thread:$0]  %s341, 2048, %s343, %s332, 64, 64, 4
        $region32: #{tpu_custom_call.1} parent=15 // pred_fallthru
          _
      $region16: #{tpu_custom_call.1} parent=5 // pred_fallthru
        _
      %p349 = scmp.le.s32.totalorder 1, %s28
      %p350 = scmp.lt.s32.totalorder %s28, 9
      %p351 = pnand %p349, %p350
      %p352 = pneg %p351
      // Predicated region
      $region33: #{tpu_custom_call.1} parent=5 // pred_check
        _
      $region34: #{tpu_custom_call.1} parent=5 // pred_check_branch
        %354 = sbr.rel (%p351) target = $region36
      $region35: #{tpu_custom_call.1} parent=5 // pred_region
        %s355 = ssub.s32 %s28, 1
        %s356 = sand.u32 %s62, 1
        %s357 = scalar_lea.sflag [#allocation3], %s356
        %s358 = sand.u32 %s62, 1
        %s359 = smul.addr %s358, 256
        %s360 = scalar_lea.vmem [#allocation2], %s359
        // Predicated region
        $region37: #{tpu_custom_call.1} parent=35 // pred_check
          %p361 = pneg %p75
        $region38: #{tpu_custom_call.1} parent=35 // pred_check_branch
          %363 = sbr.rel (%p361) target = $region40
        $region39: #{tpu_custom_call.1} parent=35 // pred_region
          %364 = dma.done %s357, 4096
        $region40: #{tpu_custom_call.1} parent=35 // pred_fallthru
          _
        %s365 = sand.u32 %s33, 1
        %s366 = scalar_lea.sflag [#allocation6], %s365
        %s367 = sand.u32 %s88, 1
        %s368 = smul.addr %s367, 128
        %s369 = scalar_lea.vmem [#allocation5], %s368
        // Predicated region
        $region41: #{tpu_custom_call.1} parent=35 // pred_check
          %p370 = pneg %p101
        $region42: #{tpu_custom_call.1} parent=35 // pred_check_branch
          %372 = sbr.rel (%p370) target = $region44
        $region43: #{tpu_custom_call.1} parent=35 // pred_region
          %373 = dma.done %s366, 2048
        $region44: #{tpu_custom_call.1} parent=35 // pred_fallthru
          _
        %s374 = sand.u32 %s33, 1
        %s375 = scalar_lea.sflag [#allocation6], %s374
        %s376 = sand.u32 %s114, 1
        %s377 = smul.addr %s376, 128
        %s378 = scalar_lea.vmem [#allocation7], %s377
        // Predicated region
        $region45: #{tpu_custom_call.1} parent=35 // pred_check
          %p379 = pneg %p127
        $region46: #{tpu_custom_call.1} parent=35 // pred_check_branch
          %381 = sbr.rel (%p379) target = $region48
        $region47: #{tpu_custom_call.1} parent=35 // pred_region
          %382 = dma.done %s375, 2048
        $region48: #{tpu_custom_call.1} parent=35 // pred_fallthru
          _
        %s383 = sand.u32 %s140, 1
        %s384 = scalar_lea.sflag [#allocation9], %s383
        %s385 = sand.u32 %s140, 1
        %s386 = smul.addr %s385, 128
        %s387 = scalar_lea.vmem [#allocation8], %s386
        // Predicated region
        $region49: #{tpu_custom_call.1} parent=35 // pred_check
          %p388 = pneg %p153
        $region50: #{tpu_custom_call.1} parent=35 // pred_check_branch
          %390 = sbr.rel (%p388) target = $region52
        $region51: #{tpu_custom_call.1} parent=35 // pred_region
          %391 = dma.done %s384, 2048
        $region52: #{tpu_custom_call.1} parent=35 // pred_fallthru
          _
        %s392 = sand.u32 %s62, 1
        %s393 = scalar_lea.sflag [#allocation3], %s392
        %s394 = sand.u32 %s62, 1
        %s395 = smul.addr %s394, 256
        %s396 = scalar_lea.vmem [#allocation2], %s395
        %p397 = pneg %p75
        %p398 = pneg %p72
        %s399 = sand.u32 %s33, 1
        %s400 = scalar_lea.sflag [#allocation6], %s399
        %s401 = sand.u32 %s88, 1
        %s402 = smul.addr %s401, 128
        %s403 = scalar_lea.vmem [#allocation5], %s402
        %p404 = pneg %p101
        %p405 = pneg %p98
        %s406 = sand.u32 %s33, 1
        %s407 = scalar_lea.sflag [#allocation6], %s406
        %s408 = sand.u32 %s114, 1
        %s409 = smul.addr %s408, 128
        %s410 = scalar_lea.vmem [#allocation7], %s409
        %p411 = pneg %p127
        %p412 = pneg %p124
        %s413 = sand.u32 %s140, 1
        %s414 = scalar_lea.sflag [#allocation9], %s413
        %s415 = sand.u32 %s140, 1
        %s416 = smul.addr %s415, 128
        %s417 = scalar_lea.vmem [#allocation8], %s416
        %p418 = pneg %p153
        %p419 = pneg %p150
        %p420 = pneg %p183
        %p421 = pneg %p180
        %s422 = sand.u32 %s170, 1
        %s423 = scalar_lea.sflag [#allocation4], %s422
        %s424 = sand.u32 %s170, 1
        %s425 = smul.addr %s424, 128
        %s426 = scalar_lea.vmem [#allocation10], %s425
        %p427 = pneg %p213
        %p428 = pneg %p210
        %s429 = sand.u32 %s33, 1
        %s430 = scalar_lea.sflag [#allocation12], %s429
        %s431 = sand.u32 %s200, 1
        %s432 = smul.addr %s431, 128
        %s433 = scalar_lea.vmem [#allocation11], %s432
        %p434 = pneg %p243
        %p435 = pneg %p240
        %s436 = sand.u32 %s33, 1
        %s437 = scalar_lea.sflag [#allocation12], %s436
        %s438 = sand.u32 %s230, 1
        %s439 = smul.addr %s438, 128
        %s440 = scalar_lea.vmem [#allocation13], %s439
        %s441 = smul.u32 32, %s39
        %s442 = smul.u32 32, %s39
        %s443 = smul.u32 32, %s39
        %s444 = smul.u32 32, %s39
        %v446 = vld [vmem:[%s360] sm:$0xff]
        %v447 = vld [vmem:[%s360 + $0x8] sm:$0xff]
        %v448 = vld [vmem:[%s360 + $0x10] sm:$0xff]
        %v449 = vld [vmem:[%s360 + $0x18] sm:$0xff]
        %v450 = vld [vmem:[%s360 + $0x20] sm:$0xff]
        %v451 = vld [vmem:[%s360 + $0x28] sm:$0xff]
        %v452 = vld [vmem:[%s360 + $0x30] sm:$0xff]
        %v453 = vld [vmem:[%s360 + $0x38] sm:$0xff]
        %v454 = vld [vmem:[%s360 + $0x40] sm:$0xff]
        %v455 = vld [vmem:[%s360 + $0x48] sm:$0xff]
        %v456 = vld [vmem:[%s360 + $0x50] sm:$0xff]
        %v457 = vld [vmem:[%s360 + $0x58] sm:$0xff]
        %v458 = vld [vmem:[%s360 + $0x60] sm:$0xff]
        %v459 = vld [vmem:[%s360 + $0x68] sm:$0xff]
        %v460 = vld [vmem:[%s360 + $0x70] sm:$0xff]
        %v461 = vld [vmem:[%s360 + $0x78] sm:$0xff]
        %v462 = vld [vmem:[%s360 + $0x80] sm:$0xff]
        %v463 = vld [vmem:[%s360 + $0x88] sm:$0xff]
        %v464 = vld [vmem:[%s360 + $0x90] sm:$0xff]
        %v465 = vld [vmem:[%s360 + $0x98] sm:$0xff]
        %v466 = vld [vmem:[%s360 + $0xa0] sm:$0xff]
        %v467 = vld [vmem:[%s360 + $0xa8] sm:$0xff]
        %v468 = vld [vmem:[%s360 + $0xb0] sm:$0xff]
        %v469 = vld [vmem:[%s360 + $0xb8] sm:$0xff]
        %v470 = vld [vmem:[%s360 + $0xc0] sm:$0xff]
        %v471 = vld [vmem:[%s360 + $0xc8] sm:$0xff]
        %v472 = vld [vmem:[%s360 + $0xd0] sm:$0xff]
        %v473 = vld [vmem:[%s360 + $0xd8] sm:$0xff]
        %v474 = vld [vmem:[%s360 + $0xe0] sm:$0xff]
        %v475 = vld [vmem:[%s360 + $0xe8] sm:$0xff]
        %v476 = vld [vmem:[%s360 + $0xf0] sm:$0xff]
        %v477 = vld [vmem:[%s360 + $0xf8] sm:$0xff]
        %v478 = vld [vmem:[%s369] sm:$0xf]
        %v479 = vld [vmem:[%s369 + $0x4] sm:$0xf]
        %v480 = vld [vmem:[%s369 + $0x8] sm:$0xf]
        %v481 = vld [vmem:[%s369 + $0xc] sm:$0xf]
        %v482 = vld [vmem:[%s369 + $0x10] sm:$0xf]
        %v483 = vld [vmem:[%s369 + $0x14] sm:$0xf]
        %v484 = vld [vmem:[%s369 + $0x18] sm:$0xf]
        %v485 = vld [vmem:[%s369 + $0x1c] sm:$0xf]
        %v486 = vld [vmem:[%s369 + $0x20] sm:$0xf]
        %v487 = vld [vmem:[%s369 + $0x24] sm:$0xf]
        %v488 = vld [vmem:[%s369 + $0x28] sm:$0xf]
        %v489 = vld [vmem:[%s369 + $0x2c] sm:$0xf]
        %v490 = vld [vmem:[%s369 + $0x30] sm:$0xf]
        %v491 = vld [vmem:[%s369 + $0x34] sm:$0xf]
        %v492 = vld [vmem:[%s369 + $0x38] sm:$0xf]
        %v493 = vld [vmem:[%s369 + $0x3c] sm:$0xf]
        %v494 = vld [vmem:[%s369 + $0x40] sm:$0xf]
        %v495 = vld [vmem:[%s369 + $0x44] sm:$0xf]
        %v496 = vld [vmem:[%s369 + $0x48] sm:$0xf]
        %v497 = vld [vmem:[%s369 + $0x4c] sm:$0xf]
        %v498 = vld [vmem:[%s369 + $0x50] sm:$0xf]
        %v499 = vld [vmem:[%s369 + $0x54] sm:$0xf]
        %v500 = vld [vmem:[%s369 + $0x58] sm:$0xf]
        %v501 = vld [vmem:[%s369 + $0x5c] sm:$0xf]
        %v502 = vld [vmem:[%s369 + $0x60] sm:$0xf]
        %v503 = vld [vmem:[%s369 + $0x64] sm:$0xf]
        %v504 = vld [vmem:[%s369 + $0x68] sm:$0xf]
        %v505 = vld [vmem:[%s369 + $0x6c] sm:$0xf]
        %v506 = vld [vmem:[%s369 + $0x70] sm:$0xf]
        %v507 = vld [vmem:[%s369 + $0x74] sm:$0xf]
        %v508 = vld [vmem:[%s369 + $0x78] sm:$0xf]
        %v509 = vld [vmem:[%s369 + $0x7c] sm:$0xf]
        %v542 = vunpack.c.l.b16 %v446
        %v543 = vunpack.c.h.b16 %v446
        %v544 = vunpack.c.l.b16 %v447
        %v545 = vunpack.c.h.b16 %v447
        %v546 = vunpack.c.l.b16 %v448
        %v547 = vunpack.c.h.b16 %v448
        %v548 = vunpack.c.l.b16 %v449
        %v549 = vunpack.c.h.b16 %v449
        %v550 = vunpack.c.l.b16 %v450
        %v551 = vunpack.c.h.b16 %v450
        %v552 = vunpack.c.l.b16 %v451
        %v553 = vunpack.c.h.b16 %v451
        %v554 = vunpack.c.l.b16 %v452
        %v555 = vunpack.c.h.b16 %v452
        %v556 = vunpack.c.l.b16 %v453
        %v557 = vunpack.c.h.b16 %v453
        %v558 = vunpack.c.l.b16 %v454
        %v559 = vunpack.c.h.b16 %v454
        %v560 = vunpack.c.l.b16 %v455
        %v561 = vunpack.c.h.b16 %v455
        %v562 = vunpack.c.l.b16 %v456
        %v563 = vunpack.c.h.b16 %v456
        %v564 = vunpack.c.l.b16 %v457
        %v565 = vunpack.c.h.b16 %v457
        %v566 = vunpack.c.l.b16 %v458
        %v567 = vunpack.c.h.b16 %v458
        %v568 = vunpack.c.l.b16 %v459
        %v569 = vunpack.c.h.b16 %v459
        %v570 = vunpack.c.l.b16 %v460
        %v571 = vunpack.c.h.b16 %v460
        %v572 = vunpack.c.l.b16 %v461
        %v573 = vunpack.c.h.b16 %v461
        %v574 = vunpack.c.l.b16 %v462
        %v575 = vunpack.c.h.b16 %v462
        %v576 = vunpack.c.l.b16 %v463
        %v577 = vunpack.c.h.b16 %v463
        %v578 = vunpack.c.l.b16 %v464
        %v579 = vunpack.c.h.b16 %v464
        %v580 = vunpack.c.l.b16 %v465
        %v581 = vunpack.c.h.b16 %v465
        %v582 = vunpack.c.l.b16 %v466
        %v583 = vunpack.c.h.b16 %v466
        %v584 = vunpack.c.l.b16 %v467
        %v585 = vunpack.c.h.b16 %v467
        %v586 = vunpack.c.l.b16 %v468
        %v587 = vunpack.c.h.b16 %v468
        %v588 = vunpack.c.l.b16 %v469
        %v589 = vunpack.c.h.b16 %v469
        %v590 = vunpack.c.l.b16 %v470
        %v591 = vunpack.c.h.b16 %v470
        %v592 = vunpack.c.l.b16 %v471
        %v593 = vunpack.c.h.b16 %v471
        %v594 = vunpack.c.l.b16 %v472
        %v595 = vunpack.c.h.b16 %v472
        %v596 = vunpack.c.l.b16 %v473
        %v597 = vunpack.c.h.b16 %v473
        %v598 = vunpack.c.l.b16 %v474
        %v599 = vunpack.c.h.b16 %v474
        %v600 = vunpack.c.l.b16 %v475
        %v601 = vunpack.c.h.b16 %v475
        %v602 = vunpack.c.l.b16 %v476
        %v603 = vunpack.c.h.b16 %v476
        %v604 = vunpack.c.l.b16 %v477
        %v605 = vunpack.c.h.b16 %v477
        %v606 = vpack.c.b16 %v544, %v542
        %v607 = vpack.c.b16 %v545, %v543
        %v608 = vpack.c.b16 %v548, %v546
        %v609 = vpack.c.b16 %v549, %v547
        %v610 = vpack.c.b16 %v552, %v550
        %v611 = vpack.c.b16 %v553, %v551
        %v612 = vpack.c.b16 %v556, %v554
        %v613 = vpack.c.b16 %v557, %v555
        %v614 = vpack.c.b16 %v560, %v558
        %v615 = vpack.c.b16 %v561, %v559
        %v616 = vpack.c.b16 %v564, %v562
        %v617 = vpack.c.b16 %v565, %v563
        %v618 = vpack.c.b16 %v568, %v566
        %v619 = vpack.c.b16 %v569, %v567
        %v620 = vpack.c.b16 %v572, %v570
        %v621 = vpack.c.b16 %v573, %v571
        %v622 = vpack.c.b16 %v576, %v574
        %v623 = vpack.c.b16 %v577, %v575
        %v624 = vpack.c.b16 %v580, %v578
        %v625 = vpack.c.b16 %v581, %v579
        %v626 = vpack.c.b16 %v584, %v582
        %v627 = vpack.c.b16 %v585, %v583
        %v628 = vpack.c.b16 %v588, %v586
        %v629 = vpack.c.b16 %v589, %v587
        %v630 = vpack.c.b16 %v592, %v590
        %v631 = vpack.c.b16 %v593, %v591
        %v632 = vpack.c.b16 %v596, %v594
        %v633 = vpack.c.b16 %v597, %v595
        %v634 = vpack.c.b16 %v600, %v598
        %v635 = vpack.c.b16 %v601, %v599
        %v636 = vpack.c.b16 %v604, %v602
        %v637 = vpack.c.b16 %v605, %v603
        %v702 = vunpack.c.l.b16 %v478
        %v703 = vunpack.c.l.b16 %v479
        %v704 = vunpack.c.l.b16 %v480
        %v705 = vunpack.c.l.b16 %v481
        %v706 = vunpack.c.l.b16 %v482
        %v707 = vunpack.c.l.b16 %v483
        %v708 = vunpack.c.l.b16 %v484
        %v709 = vunpack.c.l.b16 %v485
        %v710 = vunpack.c.l.b16 %v486
        %v711 = vunpack.c.l.b16 %v487
        %v712 = vunpack.c.l.b16 %v488
        %v713 = vunpack.c.l.b16 %v489
        %v714 = vunpack.c.l.b16 %v490
        %v715 = vunpack.c.l.b16 %v491
        %v716 = vunpack.c.l.b16 %v492
        %v717 = vunpack.c.l.b16 %v493
        %v718 = vunpack.c.l.b16 %v494
        %v719 = vunpack.c.l.b16 %v495
        %v720 = vunpack.c.l.b16 %v496
        %v721 = vunpack.c.l.b16 %v497
        %v722 = vunpack.c.l.b16 %v498
        %v723 = vunpack.c.l.b16 %v499
        %v724 = vunpack.c.l.b16 %v500
        %v725 = vunpack.c.l.b16 %v501
        %v726 = vunpack.c.l.b16 %v502
        %v727 = vunpack.c.l.b16 %v503
        %v728 = vunpack.c.l.b16 %v504
        %v729 = vunpack.c.l.b16 %v505
        %v730 = vunpack.c.l.b16 %v506
        %v731 = vunpack.c.l.b16 %v507
        %v732 = vunpack.c.l.b16 %v508
        %v733 = vunpack.c.l.b16 %v509
        %v734 = vpack.c.b16 %v703, %v702
        %v735 = vpack.c.b16 %v705, %v704
        %v736 = vpack.c.b16 %v707, %v706
        %v737 = vpack.c.b16 %v709, %v708
        %v738 = vpack.c.b16 %v711, %v710
        %v739 = vpack.c.b16 %v713, %v712
        %v740 = vpack.c.b16 %v715, %v714
        %v741 = vpack.c.b16 %v717, %v716
        %v742 = vpack.c.b16 %v719, %v718
        %v743 = vpack.c.b16 %v721, %v720
        %v744 = vpack.c.b16 %v723, %v722
        %v745 = vpack.c.b16 %v725, %v724
        %v746 = vpack.c.b16 %v727, %v726
        %v747 = vpack.c.b16 %v729, %v728
        %v748 = vpack.c.b16 %v731, %v730
        %v749 = vpack.c.b16 %v733, %v732
        %766 = vmatprep.subr.bf16.mxu0 0
        %767 = vmatpush1.bf16.msra.mxu0 %v741
        %768 = vmatprep.subr.bf16.mxu0 0
        %769 = vmatpush1.bf16.msra.mxu0 %v740
        %770 = vmatprep.subr.bf16.mxu0 0
        %771 = vmatpush1.bf16.msra.mxu0 %v739
        %772 = vmatprep.subr.bf16.mxu0 0
        %773 = vmatpush1.bf16.msra.mxu0 %v738
        %774 = vmatprep.subr.bf16.mxu0 0
        %775 = vmatpush1.bf16.msra.mxu0 %v737
        %776 = vmatprep.subr.bf16.mxu0 0
        %777 = vmatpush1.bf16.msra.mxu0 %v736
        %778 = vmatprep.subr.bf16.mxu0 0
        %779 = vmatpush1.bf16.msra.mxu0 %v735
        %780 = vmatprep.subr.bf16.mxu0 0
        %781 = vmatpush1.bf16.msra.mxu0 %v734
        %782 = vmatprep.subr.bf16.mxu0 0
        %783 = vmatpush2.bf16.msra.mxu0 %v749
        %784 = vmatprep.subr.bf16.mxu0 0
        %785 = vmatpush2.bf16.msra.mxu0 %v748
        %786 = vmatprep.subr.bf16.mxu0 0
        %787 = vmatpush2.bf16.msra.mxu0 %v747
        %788 = vmatprep.subr.bf16.mxu0 0
        %789 = vmatpush2.bf16.msra.mxu0 %v746
        %790 = vmatprep.subr.bf16.mxu0 0
        %791 = vmatpush2.bf16.msra.mxu0 %v745
        %792 = vmatprep.subr.bf16.mxu0 0
        %793 = vmatpush2.bf16.msra.mxu0 %v744
        %794 = vmatprep.subr.bf16.mxu0 0
        %795 = vmatpush2.bf16.msra.mxu0 %v743
        %796 = vmatprep.subr.bf16.mxu0 0
        %797 = vmatpush2.bf16.msra.mxu0 %v742
        %798 = vmatprep.mubr.bf16.mxu0 %v607
        %799 = vmatmul.mubr.bf16.gmra.mxu0 %v606
        %v800 = vpop.f32.mrf.mxu0
        %v801 = vadd.f32 0.0, %v800
        %v802 = vpop.f32.mrf.mxu0
        %v803 = vpop.f32.mrf.mxu0
        %v804 = vadd.f32 0.0, %v803
        %v805 = vpop.f32.mrf.mxu0
        %806 = vmatprep.mubr.bf16.mxu0 %v609
        %807 = vmatmul.mubr.bf16.gmra.mxu0 %v608
        %v808 = vpop.f32.mrf.mxu0
        %v809 = vadd.f32 0.0, %v808
        %v810 = vpop.f32.mrf.mxu0
        %v811 = vpop.f32.mrf.mxu0
        %v812 = vadd.f32 0.0, %v811
        %v813 = vpop.f32.mrf.mxu0
        %814 = vmatprep.mubr.bf16.mxu0 %v611
        %815 = vmatmul.mubr.bf16.gmra.mxu0 %v610
        %v816 = vpop.f32.mrf.mxu0
        %v817 = vadd.f32 0.0, %v816
        %v818 = vpop.f32.mrf.mxu0
        %v819 = vpop.f32.mrf.mxu0
        %v820 = vadd.f32 0.0, %v819
        %v821 = vpop.f32.mrf.mxu0
        %822 = vmatprep.mubr.bf16.mxu0 %v613
        %823 = vmatmul.mubr.bf16.gmra.mxu0 %v612
        %v824 = vpop.f32.mrf.mxu0
        %v825 = vadd.f32 0.0, %v824
        %v826 = vpop.f32.mrf.mxu0
        %v827 = vpop.f32.mrf.mxu0
        %v828 = vadd.f32 0.0, %v827
        %v829 = vpop.f32.mrf.mxu0
        %830 = vmatprep.mubr.bf16.mxu0 %v615
        %831 = vmatmul.mubr.bf16.gmra.mxu0 %v614
        %v832 = vpop.f32.mrf.mxu0
        %v833 = vadd.f32 0.0, %v832
        %v834 = vpop.f32.mrf.mxu0
        %v835 = vpop.f32.mrf.mxu0
        %v836 = vadd.f32 0.0, %v835
        %v837 = vpop.f32.mrf.mxu0
        %838 = vmatprep.mubr.bf16.mxu0 %v617
        %839 = vmatmul.mubr.bf16.gmra.mxu0 %v616
        %v840 = vpop.f32.mrf.mxu0
        %v841 = vadd.f32 0.0, %v840
        %v842 = vpop.f32.mrf.mxu0
        %v843 = vpop.f32.mrf.mxu0
        %v844 = vadd.f32 0.0, %v843
        %v845 = vpop.f32.mrf.mxu0
        %846 = vmatprep.mubr.bf16.mxu0 %v619
        %847 = vmatmul.mubr.bf16.gmra.mxu0 %v618
        %v848 = vpop.f32.mrf.mxu0
        %v849 = vadd.f32 0.0, %v848
        %v850 = vpop.f32.mrf.mxu0
        %v851 = vpop.f32.mrf.mxu0
        %v852 = vadd.f32 0.0, %v851
        %v853 = vpop.f32.mrf.mxu0
        %854 = vmatprep.mubr.bf16.mxu0 %v621
        %855 = vmatmul.mubr.bf16.gmra.mxu0 %v620
        %v856 = vpop.f32.mrf.mxu0
        %v857 = vadd.f32 0.0, %v856
        %v858 = vpop.f32.mrf.mxu0
        %v859 = vpop.f32.mrf.mxu0
        %v860 = vadd.f32 0.0, %v859
        %v861 = vpop.f32.mrf.mxu0
        %862 = vmatprep.mubr.bf16.mxu0 %v623
        %863 = vmatmul.mubr.bf16.gmra.mxu0 %v622
        %v864 = vpop.f32.mrf.mxu0
        %v865 = vadd.f32 0.0, %v864
        %v866 = vpop.f32.mrf.mxu0
        %v867 = vpop.f32.mrf.mxu0
        %v868 = vadd.f32 0.0, %v867
        %v869 = vpop.f32.mrf.mxu0
        %870 = vmatprep.mubr.bf16.mxu0 %v625
        %871 = vmatmul.mubr.bf16.gmra.mxu0 %v624
        %v872 = vpop.f32.mrf.mxu0
        %v873 = vadd.f32 0.0, %v872
        %v874 = vpop.f32.mrf.mxu0
        %v875 = vpop.f32.mrf.mxu0
        %v876 = vadd.f32 0.0, %v875
        %v877 = vpop.f32.mrf.mxu0
        %878 = vmatprep.mubr.bf16.mxu0 %v627
        %879 = vmatmul.mubr.bf16.gmra.mxu0 %v626
        %v880 = vpop.f32.mrf.mxu0
        %v881 = vadd.f32 0.0, %v880
        %v882 = vpop.f32.mrf.mxu0
        %v883 = vpop.f32.mrf.mxu0
        %v884 = vadd.f32 0.0, %v883
        %v885 = vpop.f32.mrf.mxu0
        %886 = vmatprep.mubr.bf16.mxu0 %v629
        %887 = vmatmul.mubr.bf16.gmra.mxu0 %v628
        %v888 = vpop.f32.mrf.mxu0
        %v889 = vadd.f32 0.0, %v888
        %v890 = vpop.f32.mrf.mxu0
        %v891 = vpop.f32.mrf.mxu0
        %v892 = vadd.f32 0.0, %v891
        %v893 = vpop.f32.mrf.mxu0
        %894 = vmatprep.mubr.bf16.mxu0 %v631
        %895 = vmatmul.mubr.bf16.gmra.mxu0 %v630
        %v896 = vpop.f32.mrf.mxu0
        %v897 = vadd.f32 0.0, %v896
        %v898 = vpop.f32.mrf.mxu0
        %v899 = vpop.f32.mrf.mxu0
        %v900 = vadd.f32 0.0, %v899
        %v901 = vpop.f32.mrf.mxu0
        %902 = vmatprep.mubr.bf16.mxu0 %v633
        %903 = vmatmul.mubr.bf16.gmra.mxu0 %v632
        %v904 = vpop.f32.mrf.mxu0
        %v905 = vadd.f32 0.0, %v904
        %v906 = vpop.f32.mrf.mxu0
        %v907 = vpop.f32.mrf.mxu0
        %v908 = vadd.f32 0.0, %v907
        %v909 = vpop.f32.mrf.mxu0
        %910 = vmatprep.mubr.bf16.mxu0 %v635
        %911 = vmatmul.mubr.bf16.gmra.mxu0 %v634
        %v912 = vpop.f32.mrf.mxu0
        %v913 = vadd.f32 0.0, %v912
        %v914 = vpop.f32.mrf.mxu0
        %v915 = vpop.f32.mrf.mxu0
        %v916 = vadd.f32 0.0, %v915
        %v917 = vpop.f32.mrf.mxu0
        %918 = vmatprep.mubr.bf16.mxu0 %v637
        %919 = vmatmul.mubr.bf16.gmra.mxu0 %v636
        %v920 = vpop.f32.mrf.mxu0
        %v921 = vadd.f32 0.0, %v920
        %v922 = vpop.f32.mrf.mxu0
        %v923 = vpop.f32.mrf.mxu0
        %v924 = vadd.f32 0.0, %v923
        %v925 = vpop.f32.mrf.mxu0
        %926 = vdwg.mxu0
        %v927 = vpack.c.bf16 %v804, %v801
        %v928 = vpack.c.bf16 %v812, %v809
        %v929 = vpack.c.bf16 %v820, %v817
        %v930 = vpack.c.bf16 %v828, %v825
        %v931 = vpack.c.bf16 %v836, %v833
        %v932 = vpack.c.bf16 %v844, %v841
        %v933 = vpack.c.bf16 %v852, %v849
        %v934 = vpack.c.bf16 %v860, %v857
        %v935 = vpack.c.bf16 %v868, %v865
        %v936 = vpack.c.bf16 %v876, %v873
        %v937 = vpack.c.bf16 %v884, %v881
        %v938 = vpack.c.bf16 %v892, %v889
        %v939 = vpack.c.bf16 %v900, %v897
        %v940 = vpack.c.bf16 %v908, %v905
        %v941 = vpack.c.bf16 %v916, %v913
        %v942 = vpack.c.bf16 %v924, %v921
        %v959 = vunpack.c.l.b16 %v927
        %v960 = vunpack.c.h.b16 %v927
        %v961 = vunpack.c.l.b16 %v928
        %v962 = vunpack.c.h.b16 %v928
        %v963 = vunpack.c.l.b16 %v929
        %v964 = vunpack.c.h.b16 %v929
        %v965 = vunpack.c.l.b16 %v930
        %v966 = vunpack.c.h.b16 %v930
        %v967 = vunpack.c.l.b16 %v931
        %v968 = vunpack.c.h.b16 %v931
        %v969 = vunpack.c.l.b16 %v932
        %v970 = vunpack.c.h.b16 %v932
        %v971 = vunpack.c.l.b16 %v933
        %v972 = vunpack.c.h.b16 %v933
        %v973 = vunpack.c.l.b16 %v934
        %v974 = vunpack.c.h.b16 %v934
        %v975 = vunpack.c.l.b16 %v935
        %v976 = vunpack.c.h.b16 %v935
        %v977 = vunpack.c.l.b16 %v936
        %v978 = vunpack.c.h.b16 %v936
        %v979 = vunpack.c.l.b16 %v937
        %v980 = vunpack.c.h.b16 %v937
        %v981 = vunpack.c.l.b16 %v938
        %v982 = vunpack.c.h.b16 %v938
        %v983 = vunpack.c.l.b16 %v939
        %v984 = vunpack.c.h.b16 %v939
        %v985 = vunpack.c.l.b16 %v940
        %v986 = vunpack.c.h.b16 %v940
        %v987 = vunpack.c.l.b16 %v941
        %v988 = vunpack.c.h.b16 %v941
        %v989 = vunpack.c.l.b16 %v942
        %v990 = vunpack.c.h.b16 %v942
        %v991 = vpack.c.b16 %v959, %v959
        %v992 = vpack.c.b16 %v960, %v960
        %v993 = vpack.c.b16 %v961, %v961
        %v994 = vpack.c.b16 %v962, %v962
        %v995 = vpack.c.b16 %v963, %v963
        %v996 = vpack.c.b16 %v964, %v964
        %v997 = vpack.c.b16 %v965, %v965
        %v998 = vpack.c.b16 %v966, %v966
        %v999 = vpack.c.b16 %v967, %v967
        %v1000 = vpack.c.b16 %v968, %v968
        %v1001 = vpack.c.b16 %v969, %v969
        %v1002 = vpack.c.b16 %v970, %v970
        %v1003 = vpack.c.b16 %v971, %v971
        %v1004 = vpack.c.b16 %v972, %v972
        %v1005 = vpack.c.b16 %v973, %v973
        %v1006 = vpack.c.b16 %v974, %v974
        %v1007 = vpack.c.b16 %v975, %v975
        %v1008 = vpack.c.b16 %v976, %v976
        %v1009 = vpack.c.b16 %v977, %v977
        %v1010 = vpack.c.b16 %v978, %v978
        %v1011 = vpack.c.b16 %v979, %v979
        %v1012 = vpack.c.b16 %v980, %v980
        %v1013 = vpack.c.b16 %v981, %v981
        %v1014 = vpack.c.b16 %v982, %v982
        %v1015 = vpack.c.b16 %v983, %v983
        %v1016 = vpack.c.b16 %v984, %v984
        %v1017 = vpack.c.b16 %v985, %v985
        %v1018 = vpack.c.b16 %v986, %v986
        %v1019 = vpack.c.b16 %v987, %v987
        %v1020 = vpack.c.b16 %v988, %v988
        %v1021 = vpack.c.b16 %v989, %v989
        %v1022 = vpack.c.b16 %v990, %v990
        %1055 = vst [vmem:[%s426] sm:$0xf] %v991
        %1056 = vst [vmem:[%s426 + $0x4] sm:$0xf] %v992
        %1057 = vst [vmem:[%s426 + $0x8] sm:$0xf] %v993
        %1058 = vst [vmem:[%s426 + $0xc] sm:$0xf] %v994
        %1059 = vst [vmem:[%s426 + $0x10] sm:$0xf] %v995
        %1060 = vst [vmem:[%s426 + $0x14] sm:$0xf] %v996
        %1061 = vst [vmem:[%s426 + $0x18] sm:$0xf] %v997
        %1062 = vst [vmem:[%s426 + $0x1c] sm:$0xf] %v998
        %1063 = vst [vmem:[%s426 + $0x20] sm:$0xf] %v999
        %1064 = vst [vmem:[%s426 + $0x24] sm:$0xf] %v1000
        %1065 = vst [vmem:[%s426 + $0x28] sm:$0xf] %v1001
        %1066 = vst [vmem:[%s426 + $0x2c] sm:$0xf] %v1002
        %1067 = vst [vmem:[%s426 + $0x30] sm:$0xf] %v1003
        %1068 = vst [vmem:[%s426 + $0x34] sm:$0xf] %v1004
        %1069 = vst [vmem:[%s426 + $0x38] sm:$0xf] %v1005
        %1070 = vst [vmem:[%s426 + $0x3c] sm:$0xf] %v1006
        %1071 = vst [vmem:[%s426 + $0x40] sm:$0xf] %v1007
        %1072 = vst [vmem:[%s426 + $0x44] sm:$0xf] %v1008
        %1073 = vst [vmem:[%s426 + $0x48] sm:$0xf] %v1009
        %1074 = vst [vmem:[%s426 + $0x4c] sm:$0xf] %v1010
        %1075 = vst [vmem:[%s426 + $0x50] sm:$0xf] %v1011
        %1076 = vst [vmem:[%s426 + $0x54] sm:$0xf] %v1012
        %1077 = vst [vmem:[%s426 + $0x58] sm:$0xf] %v1013
        %1078 = vst [vmem:[%s426 + $0x5c] sm:$0xf] %v1014
        %1079 = vst [vmem:[%s426 + $0x60] sm:$0xf] %v1015
        %1080 = vst [vmem:[%s426 + $0x64] sm:$0xf] %v1016
        %1081 = vst [vmem:[%s426 + $0x68] sm:$0xf] %v1017
        %1082 = vst [vmem:[%s426 + $0x6c] sm:$0xf] %v1018
        %1083 = vst [vmem:[%s426 + $0x70] sm:$0xf] %v1019
        %1084 = vst [vmem:[%s426 + $0x74] sm:$0xf] %v1020
        %1085 = vst [vmem:[%s426 + $0x78] sm:$0xf] %v1021
        %1086 = vst [vmem:[%s426 + $0x7c] sm:$0xf] %v1022
        %v1087 = vld [vmem:[%s378] sm:$0xf]
        %v1088 = vld [vmem:[%s378 + $0x4] sm:$0xf]
        %v1089 = vld [vmem:[%s378 + $0x8] sm:$0xf]
        %v1090 = vld [vmem:[%s378 + $0xc] sm:$0xf]
        %v1091 = vld [vmem:[%s378 + $0x10] sm:$0xf]
        %v1092 = vld [vmem:[%s378 + $0x14] sm:$0xf]
        %v1093 = vld [vmem:[%s378 + $0x18] sm:$0xf]
        %v1094 = vld [vmem:[%s378 + $0x1c] sm:$0xf]
        %v1095 = vld [vmem:[%s378 + $0x20] sm:$0xf]
        %v1096 = vld [vmem:[%s378 + $0x24] sm:$0xf]
        %v1097 = vld [vmem:[%s378 + $0x28] sm:$0xf]
        %v1098 = vld [vmem:[%s378 + $0x2c] sm:$0xf]
        %v1099 = vld [vmem:[%s378 + $0x30] sm:$0xf]
        %v1100 = vld [vmem:[%s378 + $0x34] sm:$0xf]
        %v1101 = vld [vmem:[%s378 + $0x38] sm:$0xf]
        %v1102 = vld [vmem:[%s378 + $0x3c] sm:$0xf]
        %v1103 = vld [vmem:[%s378 + $0x40] sm:$0xf]
        %v1104 = vld [vmem:[%s378 + $0x44] sm:$0xf]
        %v1105 = vld [vmem:[%s378 + $0x48] sm:$0xf]
        %v1106 = vld [vmem:[%s378 + $0x4c] sm:$0xf]
        %v1107 = vld [vmem:[%s378 + $0x50] sm:$0xf]
        %v1108 = vld [vmem:[%s378 + $0x54] sm:$0xf]
        %v1109 = vld [vmem:[%s378 + $0x58] sm:$0xf]
        %v1110 = vld [vmem:[%s378 + $0x5c] sm:$0xf]
        %v1111 = vld [vmem:[%s378 + $0x60] sm:$0xf]
        %v1112 = vld [vmem:[%s378 + $0x64] sm:$0xf]
        %v1113 = vld [vmem:[%s378 + $0x68] sm:$0xf]
        %v1114 = vld [vmem:[%s378 + $0x6c] sm:$0xf]
        %v1115 = vld [vmem:[%s378 + $0x70] sm:$0xf]
        %v1116 = vld [vmem:[%s378 + $0x74] sm:$0xf]
        %v1117 = vld [vmem:[%s378 + $0x78] sm:$0xf]
        %v1118 = vld [vmem:[%s378 + $0x7c] sm:$0xf]
        %v1151 = vunpack.c.l.b16 %v1087
        %v1152 = vunpack.c.l.b16 %v1088
        %v1153 = vunpack.c.l.b16 %v1089
        %v1154 = vunpack.c.l.b16 %v1090
        %v1155 = vunpack.c.l.b16 %v1091
        %v1156 = vunpack.c.l.b16 %v1092
        %v1157 = vunpack.c.l.b16 %v1093
        %v1158 = vunpack.c.l.b16 %v1094
        %v1159 = vunpack.c.l.b16 %v1095
        %v1160 = vunpack.c.l.b16 %v1096
        %v1161 = vunpack.c.l.b16 %v1097
        %v1162 = vunpack.c.l.b16 %v1098
        %v1163 = vunpack.c.l.b16 %v1099
        %v1164 = vunpack.c.l.b16 %v1100
        %v1165 = vunpack.c.l.b16 %v1101
        %v1166 = vunpack.c.l.b16 %v1102
        %v1167 = vunpack.c.l.b16 %v1103
        %v1168 = vunpack.c.l.b16 %v1104
        %v1169 = vunpack.c.l.b16 %v1105
        %v1170 = vunpack.c.l.b16 %v1106
        %v1171 = vunpack.c.l.b16 %v1107
        %v1172 = vunpack.c.l.b16 %v1108
        %v1173 = vunpack.c.l.b16 %v1109
        %v1174 = vunpack.c.l.b16 %v1110
        %v1175 = vunpack.c.l.b16 %v1111
        %v1176 = vunpack.c.l.b16 %v1112
        %v1177 = vunpack.c.l.b16 %v1113
        %v1178 = vunpack.c.l.b16 %v1114
        %v1179 = vunpack.c.l.b16 %v1115
        %v1180 = vunpack.c.l.b16 %v1116
        %v1181 = vunpack.c.l.b16 %v1117
        %v1182 = vunpack.c.l.b16 %v1118
        %v1183 = vpack.c.b16 %v1152, %v1151
        %v1184 = vpack.c.b16 %v1154, %v1153
        %v1185 = vpack.c.b16 %v1156, %v1155
        %v1186 = vpack.c.b16 %v1158, %v1157
        %v1187 = vpack.c.b16 %v1160, %v1159
        %v1188 = vpack.c.b16 %v1162, %v1161
        %v1189 = vpack.c.b16 %v1164, %v1163
        %v1190 = vpack.c.b16 %v1166, %v1165
        %v1191 = vpack.c.b16 %v1168, %v1167
        %v1192 = vpack.c.b16 %v1170, %v1169
        %v1193 = vpack.c.b16 %v1172, %v1171
        %v1194 = vpack.c.b16 %v1174, %v1173
        %v1195 = vpack.c.b16 %v1176, %v1175
        %v1196 = vpack.c.b16 %v1178, %v1177
        %v1197 = vpack.c.b16 %v1180, %v1179
        %v1198 = vpack.c.b16 %v1182, %v1181
        %1215 = vmatprep.subr.bf16.mxu0 0
        %1216 = vmatpush1.bf16.msra.mxu0 %v1190
        %1217 = vmatprep.subr.bf16.mxu0 0
        %1218 = vmatpush1.bf16.msra.mxu0 %v1189
        %1219 = vmatprep.subr.bf16.mxu0 0
        %1220 = vmatpush1.bf16.msra.mxu0 %v1188
        %1221 = vmatprep.subr.bf16.mxu0 0
        %1222 = vmatpush1.bf16.msra.mxu0 %v1187
        %1223 = vmatprep.subr.bf16.mxu0 0
        %1224 = vmatpush1.bf16.msra.mxu0 %v1186
        %1225 = vmatprep.subr.bf16.mxu0 0
        %1226 = vmatpush1.bf16.msra.mxu0 %v1185
        %1227 = vmatprep.subr.bf16.mxu0 0
        %1228 = vmatpush1.bf16.msra.mxu0 %v1184
        %1229 = vmatprep.subr.bf16.mxu0 0
        %1230 = vmatpush1.bf16.msra.mxu0 %v1183
        %1231 = vmatprep.subr.bf16.mxu0 0
        %1232 = vmatpush2.bf16.msra.mxu0 %v1198
        %1233 = vmatprep.subr.bf16.mxu0 0
        %1234 = vmatpush2.bf16.msra.mxu0 %v1197
        %1235 = vmatprep.subr.bf16.mxu0 0
        %1236 = vmatpush2.bf16.msra.mxu0 %v1196
        %1237 = vmatprep.subr.bf16.mxu0 0
        %1238 = vmatpush2.bf16.msra.mxu0 %v1195
        %1239 = vmatprep.subr.bf16.mxu0 0
        %1240 = vmatpush2.bf16.msra.mxu0 %v1194
        %1241 = vmatprep.subr.bf16.mxu0 0
        %1242 = vmatpush2.bf16.msra.mxu0 %v1193
        %1243 = vmatprep.subr.bf16.mxu0 0
        %1244 = vmatpush2.bf16.msra.mxu0 %v1192
        %1245 = vmatprep.subr.bf16.mxu0 0
        %1246 = vmatpush2.bf16.msra.mxu0 %v1191
        %1247 = vmatprep.mubr.bf16.mxu0 %v607
        %1248 = vmatmul.mubr.bf16.gmra.mxu0 %v606
        %v1249 = vpop.f32.mrf.mxu0
        %v1250 = vadd.f32 0.0, %v1249
        %v1251 = vpop.f32.mrf.mxu0
        %v1252 = vpop.f32.mrf.mxu0
        %v1253 = vadd.f32 0.0, %v1252
        %v1254 = vpop.f32.mrf.mxu0
        %1255 = vmatprep.mubr.bf16.mxu0 %v609
        %1256 = vmatmul.mubr.bf16.gmra.mxu0 %v608
        %v1257 = vpop.f32.mrf.mxu0
        %v1258 = vadd.f32 0.0, %v1257
        %v1259 = vpop.f32.mrf.mxu0
        %v1260 = vpop.f32.mrf.mxu0
        %v1261 = vadd.f32 0.0, %v1260
        %v1262 = vpop.f32.mrf.mxu0
        %1263 = vmatprep.mubr.bf16.mxu0 %v611
        %1264 = vmatmul.mubr.bf16.gmra.mxu0 %v610
        %v1265 = vpop.f32.mrf.mxu0
        %v1266 = vadd.f32 0.0, %v1265
        %v1267 = vpop.f32.mrf.mxu0
        %v1268 = vpop.f32.mrf.mxu0
        %v1269 = vadd.f32 0.0, %v1268
        %v1270 = vpop.f32.mrf.mxu0
        %1271 = vmatprep.mubr.bf16.mxu0 %v613
        %1272 = vmatmul.mubr.bf16.gmra.mxu0 %v612
        %v1273 = vpop.f32.mrf.mxu0
        %v1274 = vadd.f32 0.0, %v1273
        %v1275 = vpop.f32.mrf.mxu0
        %v1276 = vpop.f32.mrf.mxu0
        %v1277 = vadd.f32 0.0, %v1276
        %v1278 = vpop.f32.mrf.mxu0
        %1279 = vmatprep.mubr.bf16.mxu0 %v615
        %1280 = vmatmul.mubr.bf16.gmra.mxu0 %v614
        %v1281 = vpop.f32.mrf.mxu0
        %v1282 = vadd.f32 0.0, %v1281
        %v1283 = vpop.f32.mrf.mxu0
        %v1284 = vpop.f32.mrf.mxu0
        %v1285 = vadd.f32 0.0, %v1284
        %v1286 = vpop.f32.mrf.mxu0
        %1287 = vmatprep.mubr.bf16.mxu0 %v617
        %1288 = vmatmul.mubr.bf16.gmra.mxu0 %v616
        %v1289 = vpop.f32.mrf.mxu0
        %v1290 = vadd.f32 0.0, %v1289
        %v1291 = vpop.f32.mrf.mxu0
        %v1292 = vpop.f32.mrf.mxu0
        %v1293 = vadd.f32 0.0, %v1292
        %v1294 = vpop.f32.mrf.mxu0
        %1295 = vmatprep.mubr.bf16.mxu0 %v619
        %1296 = vmatmul.mubr.bf16.gmra.mxu0 %v618
        %v1297 = vpop.f32.mrf.mxu0
        %v1298 = vadd.f32 0.0, %v1297
        %v1299 = vpop.f32.mrf.mxu0
        %v1300 = vpop.f32.mrf.mxu0
        %v1301 = vadd.f32 0.0, %v1300
        %v1302 = vpop.f32.mrf.mxu0
        %1303 = vmatprep.mubr.bf16.mxu0 %v621
        %1304 = vmatmul.mubr.bf16.gmra.mxu0 %v620
        %v1305 = vpop.f32.mrf.mxu0
        %v1306 = vadd.f32 0.0, %v1305
        %v1307 = vpop.f32.mrf.mxu0
        %v1308 = vpop.f32.mrf.mxu0
        %v1309 = vadd.f32 0.0, %v1308
        %v1310 = vpop.f32.mrf.mxu0
        %1311 = vmatprep.mubr.bf16.mxu0 %v623
        %1312 = vmatmul.mubr.bf16.gmra.mxu0 %v622
        %v1313 = vpop.f32.mrf.mxu0
        %v1314 = vadd.f32 0.0, %v1313
        %v1315 = vpop.f32.mrf.mxu0
        %v1316 = vpop.f32.mrf.mxu0
        %v1317 = vadd.f32 0.0, %v1316
        %v1318 = vpop.f32.mrf.mxu0
        %1319 = vmatprep.mubr.bf16.mxu0 %v625
        %1320 = vmatmul.mubr.bf16.gmra.mxu0 %v624
        %v1321 = vpop.f32.mrf.mxu0
        %v1322 = vadd.f32 0.0, %v1321
        %v1323 = vpop.f32.mrf.mxu0
        %v1324 = vpop.f32.mrf.mxu0
        %v1325 = vadd.f32 0.0, %v1324
        %v1326 = vpop.f32.mrf.mxu0
        %1327 = vmatprep.mubr.bf16.mxu0 %v627
        %1328 = vmatmul.mubr.bf16.gmra.mxu0 %v626
        %v1329 = vpop.f32.mrf.mxu0
        %v1330 = vadd.f32 0.0, %v1329
        %v1331 = vpop.f32.mrf.mxu0
        %v1332 = vpop.f32.mrf.mxu0
        %v1333 = vadd.f32 0.0, %v1332
        %v1334 = vpop.f32.mrf.mxu0
        %1335 = vmatprep.mubr.bf16.mxu0 %v629
        %1336 = vmatmul.mubr.bf16.gmra.mxu0 %v628
        %v1337 = vpop.f32.mrf.mxu0
        %v1338 = vadd.f32 0.0, %v1337
        %v1339 = vpop.f32.mrf.mxu0
        %v1340 = vpop.f32.mrf.mxu0
        %v1341 = vadd.f32 0.0, %v1340
        %v1342 = vpop.f32.mrf.mxu0
        %1343 = vmatprep.mubr.bf16.mxu0 %v631
        %1344 = vmatmul.mubr.bf16.gmra.mxu0 %v630
        %v1345 = vpop.f32.mrf.mxu0
        %v1346 = vadd.f32 0.0, %v1345
        %v1347 = vpop.f32.mrf.mxu0
        %v1348 = vpop.f32.mrf.mxu0
        %v1349 = vadd.f32 0.0, %v1348
        %v1350 = vpop.f32.mrf.mxu0
        %1351 = vmatprep.mubr.bf16.mxu0 %v633
        %1352 = vmatmul.mubr.bf16.gmra.mxu0 %v632
        %v1353 = vpop.f32.mrf.mxu0
        %v1354 = vadd.f32 0.0, %v1353
        %v1355 = vpop.f32.mrf.mxu0
        %v1356 = vpop.f32.mrf.mxu0
        %v1357 = vadd.f32 0.0, %v1356
        %v1358 = vpop.f32.mrf.mxu0
        %1359 = vmatprep.mubr.bf16.mxu0 %v635
        %1360 = vmatmul.mubr.bf16.gmra.mxu0 %v634
        %v1361 = vpop.f32.mrf.mxu0
        %v1362 = vadd.f32 0.0, %v1361
        %v1363 = vpop.f32.mrf.mxu0
        %v1364 = vpop.f32.mrf.mxu0
        %v1365 = vadd.f32 0.0, %v1364
        %v1366 = vpop.f32.mrf.mxu0
        %1367 = vmatprep.mubr.bf16.mxu0 %v637
        %1368 = vmatmul.mubr.bf16.gmra.mxu0 %v636
        %v1369 = vpop.f32.mrf.mxu0
        %v1370 = vadd.f32 0.0, %v1369
        %v1371 = vpop.f32.mrf.mxu0
        %v1372 = vpop.f32.mrf.mxu0
        %v1373 = vadd.f32 0.0, %v1372
        %v1374 = vpop.f32.mrf.mxu0
        %1375 = vdwg.mxu0
        %v1376 = vpack.c.bf16 %v1253, %v1250
        %v1377 = vpack.c.bf16 %v1261, %v1258
        %v1378 = vpack.c.bf16 %v1269, %v1266
        %v1379 = vpack.c.bf16 %v1277, %v1274
        %v1380 = vpack.c.bf16 %v1285, %v1282
        %v1381 = vpack.c.bf16 %v1293, %v1290
        %v1382 = vpack.c.bf16 %v1301, %v1298
        %v1383 = vpack.c.bf16 %v1309, %v1306
        %v1384 = vpack.c.bf16 %v1317, %v1314
        %v1385 = vpack.c.bf16 %v1325, %v1322
        %v1386 = vpack.c.bf16 %v1333, %v1330
        %v1387 = vpack.c.bf16 %v1341, %v1338
        %v1388 = vpack.c.bf16 %v1349, %v1346
        %v1389 = vpack.c.bf16 %v1357, %v1354
        %v1390 = vpack.c.bf16 %v1365, %v1362
        %v1391 = vpack.c.bf16 %v1373, %v1370
        %v1408 = vunpack.c.l.b16 %v1376
        %v1409 = vunpack.c.h.b16 %v1376
        %v1410 = vunpack.c.l.b16 %v1377
        %v1411 = vunpack.c.h.b16 %v1377
        %v1412 = vunpack.c.l.b16 %v1378
        %v1413 = vunpack.c.h.b16 %v1378
        %v1414 = vunpack.c.l.b16 %v1379
        %v1415 = vunpack.c.h.b16 %v1379
        %v1416 = vunpack.c.l.b16 %v1380
        %v1417 = vunpack.c.h.b16 %v1380
        %v1418 = vunpack.c.l.b16 %v1381
        %v1419 = vunpack.c.h.b16 %v1381
        %v1420 = vunpack.c.l.b16 %v1382
        %v1421 = vunpack.c.h.b16 %v1382
        %v1422 = vunpack.c.l.b16 %v1383
        %v1423 = vunpack.c.h.b16 %v1383
        %v1424 = vunpack.c.l.b16 %v1384
        %v1425 = vunpack.c.h.b16 %v1384
        %v1426 = vunpack.c.l.b16 %v1385
        %v1427 = vunpack.c.h.b16 %v1385
        %v1428 = vunpack.c.l.b16 %v1386
        %v1429 = vunpack.c.h.b16 %v1386
        %v1430 = vunpack.c.l.b16 %v1387
        %v1431 = vunpack.c.h.b16 %v1387
        %v1432 = vunpack.c.l.b16 %v1388
        %v1433 = vunpack.c.h.b16 %v1388
        %v1434 = vunpack.c.l.b16 %v1389
        %v1435 = vunpack.c.h.b16 %v1389
        %v1436 = vunpack.c.l.b16 %v1390
        %v1437 = vunpack.c.h.b16 %v1390
        %v1438 = vunpack.c.l.b16 %v1391
        %v1439 = vunpack.c.h.b16 %v1391
        %v1440 = vpack.c.b16 %v1408, %v1408
        %v1441 = vpack.c.b16 %v1409, %v1409
        %v1442 = vpack.c.b16 %v1410, %v1410
        %v1443 = vpack.c.b16 %v1411, %v1411
        %v1444 = vpack.c.b16 %v1412, %v1412
        %v1445 = vpack.c.b16 %v1413, %v1413
        %v1446 = vpack.c.b16 %v1414, %v1414
        %v1447 = vpack.c.b16 %v1415, %v1415
        %v1448 = vpack.c.b16 %v1416, %v1416
        %v1449 = vpack.c.b16 %v1417, %v1417
        %v1450 = vpack.c.b16 %v1418, %v1418
        %v1451 = vpack.c.b16 %v1419, %v1419
        %v1452 = vpack.c.b16 %v1420, %v1420
        %v1453 = vpack.c.b16 %v1421, %v1421
        %v1454 = vpack.c.b16 %v1422, %v1422
        %v1455 = vpack.c.b16 %v1423, %v1423
        %v1456 = vpack.c.b16 %v1424, %v1424
        %v1457 = vpack.c.b16 %v1425, %v1425
        %v1458 = vpack.c.b16 %v1426, %v1426
        %v1459 = vpack.c.b16 %v1427, %v1427
        %v1460 = vpack.c.b16 %v1428, %v1428
        %v1461 = vpack.c.b16 %v1429, %v1429
        %v1462 = vpack.c.b16 %v1430, %v1430
        %v1463 = vpack.c.b16 %v1431, %v1431
        %v1464 = vpack.c.b16 %v1432, %v1432
        %v1465 = vpack.c.b16 %v1433, %v1433
        %v1466 = vpack.c.b16 %v1434, %v1434
        %v1467 = vpack.c.b16 %v1435, %v1435
        %v1468 = vpack.c.b16 %v1436, %v1436
        %v1469 = vpack.c.b16 %v1437, %v1437
        %v1470 = vpack.c.b16 %v1438, %v1438
        %v1471 = vpack.c.b16 %v1439, %v1439
        %1504 = vst [vmem:[%s433] sm:$0xf] %v1440
        %1505 = vst [vmem:[%s433 + $0x4] sm:$0xf] %v1441
        %1506 = vst [vmem:[%s433 + $0x8] sm:$0xf] %v1442
        %1507 = vst [vmem:[%s433 + $0xc] sm:$0xf] %v1443
        %1508 = vst [vmem:[%s433 + $0x10] sm:$0xf] %v1444
        %1509 = vst [vmem:[%s433 + $0x14] sm:$0xf] %v1445
        %1510 = vst [vmem:[%s433 + $0x18] sm:$0xf] %v1446
        %1511 = vst [vmem:[%s433 + $0x1c] sm:$0xf] %v1447
        %1512 = vst [vmem:[%s433 + $0x20] sm:$0xf] %v1448
        %1513 = vst [vmem:[%s433 + $0x24] sm:$0xf] %v1449
        %1514 = vst [vmem:[%s433 + $0x28] sm:$0xf] %v1450
        %1515 = vst [vmem:[%s433 + $0x2c] sm:$0xf] %v1451
        %1516 = vst [vmem:[%s433 + $0x30] sm:$0xf] %v1452
        %1517 = vst [vmem:[%s433 + $0x34] sm:$0xf] %v1453
        %1518 = vst [vmem:[%s433 + $0x38] sm:$0xf] %v1454
        %1519 = vst [vmem:[%s433 + $0x3c] sm:$0xf] %v1455
        %1520 = vst [vmem:[%s433 + $0x40] sm:$0xf] %v1456
        %1521 = vst [vmem:[%s433 + $0x44] sm:$0xf] %v1457
        %1522 = vst [vmem:[%s433 + $0x48] sm:$0xf] %v1458
        %1523 = vst [vmem:[%s433 + $0x4c] sm:$0xf] %v1459
        %1524 = vst [vmem:[%s433 + $0x50] sm:$0xf] %v1460
        %1525 = vst [vmem:[%s433 + $0x54] sm:$0xf] %v1461
        %1526 = vst [vmem:[%s433 + $0x58] sm:$0xf] %v1462
        %1527 = vst [vmem:[%s433 + $0x5c] sm:$0xf] %v1463
        %1528 = vst [vmem:[%s433 + $0x60] sm:$0xf] %v1464
        %1529 = vst [vmem:[%s433 + $0x64] sm:$0xf] %v1465
        %1530 = vst [vmem:[%s433 + $0x68] sm:$0xf] %v1466
        %1531 = vst [vmem:[%s433 + $0x6c] sm:$0xf] %v1467
        %1532 = vst [vmem:[%s433 + $0x70] sm:$0xf] %v1468
        %1533 = vst [vmem:[%s433 + $0x74] sm:$0xf] %v1469
        %1534 = vst [vmem:[%s433 + $0x78] sm:$0xf] %v1470
        %1535 = vst [vmem:[%s433 + $0x7c] sm:$0xf] %v1471
        %v1536 = vld [vmem:[%s387] sm:$0xf]
        %v1537 = vld [vmem:[%s387 + $0x4] sm:$0xf]
        %v1538 = vld [vmem:[%s387 + $0x8] sm:$0xf]
        %v1539 = vld [vmem:[%s387 + $0xc] sm:$0xf]
        %v1540 = vld [vmem:[%s387 + $0x10] sm:$0xf]
        %v1541 = vld [vmem:[%s387 + $0x14] sm:$0xf]
        %v1542 = vld [vmem:[%s387 + $0x18] sm:$0xf]
        %v1543 = vld [vmem:[%s387 + $0x1c] sm:$0xf]
        %v1544 = vld [vmem:[%s387 + $0x20] sm:$0xf]
        %v1545 = vld [vmem:[%s387 + $0x24] sm:$0xf]
        %v1546 = vld [vmem:[%s387 + $0x28] sm:$0xf]
        %v1547 = vld [vmem:[%s387 + $0x2c] sm:$0xf]
        %v1548 = vld [vmem:[%s387 + $0x30] sm:$0xf]
        %v1549 = vld [vmem:[%s387 + $0x34] sm:$0xf]
        %v1550 = vld [vmem:[%s387 + $0x38] sm:$0xf]
        %v1551 = vld [vmem:[%s387 + $0x3c] sm:$0xf]
        %v1552 = vld [vmem:[%s387 + $0x40] sm:$0xf]
        %v1553 = vld [vmem:[%s387 + $0x44] sm:$0xf]
        %v1554 = vld [vmem:[%s387 + $0x48] sm:$0xf]
        %v1555 = vld [vmem:[%s387 + $0x4c] sm:$0xf]
        %v1556 = vld [vmem:[%s387 + $0x50] sm:$0xf]
        %v1557 = vld [vmem:[%s387 + $0x54] sm:$0xf]
        %v1558 = vld [vmem:[%s387 + $0x58] sm:$0xf]
        %v1559 = vld [vmem:[%s387 + $0x5c] sm:$0xf]
        %v1560 = vld [vmem:[%s387 + $0x60] sm:$0xf]
        %v1561 = vld [vmem:[%s387 + $0x64] sm:$0xf]
        %v1562 = vld [vmem:[%s387 + $0x68] sm:$0xf]
        %v1563 = vld [vmem:[%s387 + $0x6c] sm:$0xf]
        %v1564 = vld [vmem:[%s387 + $0x70] sm:$0xf]
        %v1565 = vld [vmem:[%s387 + $0x74] sm:$0xf]
        %v1566 = vld [vmem:[%s387 + $0x78] sm:$0xf]
        %v1567 = vld [vmem:[%s387 + $0x7c] sm:$0xf]
        %v1600 = vunpack.c.l.b16 %v1536
        %v1601 = vunpack.c.l.b16 %v1537
        %v1602 = vunpack.c.l.b16 %v1538
        %v1603 = vunpack.c.l.b16 %v1539
        %v1604 = vunpack.c.l.b16 %v1540
        %v1605 = vunpack.c.l.b16 %v1541
        %v1606 = vunpack.c.l.b16 %v1542
        %v1607 = vunpack.c.l.b16 %v1543
        %v1608 = vunpack.c.l.b16 %v1544
        %v1609 = vunpack.c.l.b16 %v1545
        %v1610 = vunpack.c.l.b16 %v1546
        %v1611 = vunpack.c.l.b16 %v1547
        %v1612 = vunpack.c.l.b16 %v1548
        %v1613 = vunpack.c.l.b16 %v1549
        %v1614 = vunpack.c.l.b16 %v1550
        %v1615 = vunpack.c.l.b16 %v1551
        %v1616 = vunpack.c.l.b16 %v1552
        %v1617 = vunpack.c.l.b16 %v1553
        %v1618 = vunpack.c.l.b16 %v1554
        %v1619 = vunpack.c.l.b16 %v1555
        %v1620 = vunpack.c.l.b16 %v1556
        %v1621 = vunpack.c.l.b16 %v1557
        %v1622 = vunpack.c.l.b16 %v1558
        %v1623 = vunpack.c.l.b16 %v1559
        %v1624 = vunpack.c.l.b16 %v1560
        %v1625 = vunpack.c.l.b16 %v1561
        %v1626 = vunpack.c.l.b16 %v1562
        %v1627 = vunpack.c.l.b16 %v1563
        %v1628 = vunpack.c.l.b16 %v1564
        %v1629 = vunpack.c.l.b16 %v1565
        %v1630 = vunpack.c.l.b16 %v1566
        %v1631 = vunpack.c.l.b16 %v1567
        %v1632 = vpack.c.b16 %v1601, %v1600
        %v1633 = vpack.c.b16 %v1603, %v1602
        %v1634 = vpack.c.b16 %v1605, %v1604
        %v1635 = vpack.c.b16 %v1607, %v1606
        %v1636 = vpack.c.b16 %v1609, %v1608
        %v1637 = vpack.c.b16 %v1611, %v1610
        %v1638 = vpack.c.b16 %v1613, %v1612
        %v1639 = vpack.c.b16 %v1615, %v1614
        %v1640 = vpack.c.b16 %v1617, %v1616
        %v1641 = vpack.c.b16 %v1619, %v1618
        %v1642 = vpack.c.b16 %v1621, %v1620
        %v1643 = vpack.c.b16 %v1623, %v1622
        %v1644 = vpack.c.b16 %v1625, %v1624
        %v1645 = vpack.c.b16 %v1627, %v1626
        %v1646 = vpack.c.b16 %v1629, %v1628
        %v1647 = vpack.c.b16 %v1631, %v1630
        %1664 = vmatprep.subr.bf16.mxu0 0
        %1665 = vmatpush1.bf16.msra.mxu0 %v1639
        %1666 = vmatprep.subr.bf16.mxu0 0
        %1667 = vmatpush1.bf16.msra.mxu0 %v1638
        %1668 = vmatprep.subr.bf16.mxu0 0
        %1669 = vmatpush1.bf16.msra.mxu0 %v1637
        %1670 = vmatprep.subr.bf16.mxu0 0
        %1671 = vmatpush1.bf16.msra.mxu0 %v1636
        %1672 = vmatprep.subr.bf16.mxu0 0
        %1673 = vmatpush1.bf16.msra.mxu0 %v1635
        %1674 = vmatprep.subr.bf16.mxu0 0
        %1675 = vmatpush1.bf16.msra.mxu0 %v1634
        %1676 = vmatprep.subr.bf16.mxu0 0
        %1677 = vmatpush1.bf16.msra.mxu0 %v1633
        %1678 = vmatprep.subr.bf16.mxu0 0
        %1679 = vmatpush1.bf16.msra.mxu0 %v1632
        %1680 = vmatprep.subr.bf16.mxu0 0
        %1681 = vmatpush2.bf16.msra.mxu0 %v1647
        %1682 = vmatprep.subr.bf16.mxu0 0
        %1683 = vmatpush2.bf16.msra.mxu0 %v1646
        %1684 = vmatprep.subr.bf16.mxu0 0
        %1685 = vmatpush2.bf16.msra.mxu0 %v1645
        %1686 = vmatprep.subr.bf16.mxu0 0
        %1687 = vmatpush2.bf16.msra.mxu0 %v1644
        %1688 = vmatprep.subr.bf16.mxu0 0
        %1689 = vmatpush2.bf16.msra.mxu0 %v1643
        %1690 = vmatprep.subr.bf16.mxu0 0
        %1691 = vmatpush2.bf16.msra.mxu0 %v1642
        %1692 = vmatprep.subr.bf16.mxu0 0
        %1693 = vmatpush2.bf16.msra.mxu0 %v1641
        %1694 = vmatprep.subr.bf16.mxu0 0
        %1695 = vmatpush2.bf16.msra.mxu0 %v1640
        %1696 = vmatprep.mubr.bf16.mxu0 %v607
        %1697 = vmatmul.mubr.bf16.gmra.mxu0 %v606
        %v1698 = vpop.f32.mrf.mxu0
        %v1699 = vadd.f32 0.0, %v1698
        %v1700 = vpop.f32.mrf.mxu0
        %v1701 = vpop.f32.mrf.mxu0
        %v1702 = vadd.f32 0.0, %v1701
        %v1703 = vpop.f32.mrf.mxu0
        %1704 = vmatprep.mubr.bf16.mxu0 %v609
        %1705 = vmatmul.mubr.bf16.gmra.mxu0 %v608
        %v1706 = vpop.f32.mrf.mxu0
        %v1707 = vadd.f32 0.0, %v1706
        %v1708 = vpop.f32.mrf.mxu0
        %v1709 = vpop.f32.mrf.mxu0
        %v1710 = vadd.f32 0.0, %v1709
        %v1711 = vpop.f32.mrf.mxu0
        %1712 = vmatprep.mubr.bf16.mxu0 %v611
        %1713 = vmatmul.mubr.bf16.gmra.mxu0 %v610
        %v1714 = vpop.f32.mrf.mxu0
        %v1715 = vadd.f32 0.0, %v1714
        %v1716 = vpop.f32.mrf.mxu0
        %v1717 = vpop.f32.mrf.mxu0
        %v1718 = vadd.f32 0.0, %v1717
        %v1719 = vpop.f32.mrf.mxu0
        %1720 = vmatprep.mubr.bf16.mxu0 %v613
        %1721 = vmatmul.mubr.bf16.gmra.mxu0 %v612
        %v1722 = vpop.f32.mrf.mxu0
        %v1723 = vadd.f32 0.0, %v1722
        %v1724 = vpop.f32.mrf.mxu0
        %v1725 = vpop.f32.mrf.mxu0
        %v1726 = vadd.f32 0.0, %v1725
        %v1727 = vpop.f32.mrf.mxu0
        %1728 = vmatprep.mubr.bf16.mxu0 %v615
        %1729 = vmatmul.mubr.bf16.gmra.mxu0 %v614
        %v1730 = vpop.f32.mrf.mxu0
        %v1731 = vadd.f32 0.0, %v1730
        %v1732 = vpop.f32.mrf.mxu0
        %v1733 = vpop.f32.mrf.mxu0
        %v1734 = vadd.f32 0.0, %v1733
        %v1735 = vpop.f32.mrf.mxu0
        %1736 = vmatprep.mubr.bf16.mxu0 %v617
        %1737 = vmatmul.mubr.bf16.gmra.mxu0 %v616
        %v1738 = vpop.f32.mrf.mxu0
        %v1739 = vadd.f32 0.0, %v1738
        %v1740 = vpop.f32.mrf.mxu0
        %v1741 = vpop.f32.mrf.mxu0
        %v1742 = vadd.f32 0.0, %v1741
        %v1743 = vpop.f32.mrf.mxu0
        %1744 = vmatprep.mubr.bf16.mxu0 %v619
        %1745 = vmatmul.mubr.bf16.gmra.mxu0 %v618
        %v1746 = vpop.f32.mrf.mxu0
        %v1747 = vadd.f32 0.0, %v1746
        %v1748 = vpop.f32.mrf.mxu0
        %v1749 = vpop.f32.mrf.mxu0
        %v1750 = vadd.f32 0.0, %v1749
        %v1751 = vpop.f32.mrf.mxu0
        %1752 = vmatprep.mubr.bf16.mxu0 %v621
        %1753 = vmatmul.mubr.bf16.gmra.mxu0 %v620
        %v1754 = vpop.f32.mrf.mxu0
        %v1755 = vadd.f32 0.0, %v1754
        %v1756 = vpop.f32.mrf.mxu0
        %v1757 = vpop.f32.mrf.mxu0
        %v1758 = vadd.f32 0.0, %v1757
        %v1759 = vpop.f32.mrf.mxu0
        %1760 = vmatprep.mubr.bf16.mxu0 %v623
        %1761 = vmatmul.mubr.bf16.gmra.mxu0 %v622
        %v1762 = vpop.f32.mrf.mxu0
        %v1763 = vadd.f32 0.0, %v1762
        %v1764 = vpop.f32.mrf.mxu0
        %v1765 = vpop.f32.mrf.mxu0
        %v1766 = vadd.f32 0.0, %v1765
        %v1767 = vpop.f32.mrf.mxu0
        %1768 = vmatprep.mubr.bf16.mxu0 %v625
        %1769 = vmatmul.mubr.bf16.gmra.mxu0 %v624
        %v1770 = vpop.f32.mrf.mxu0
        %v1771 = vadd.f32 0.0, %v1770
        %v1772 = vpop.f32.mrf.mxu0
        %v1773 = vpop.f32.mrf.mxu0
        %v1774 = vadd.f32 0.0, %v1773
        %v1775 = vpop.f32.mrf.mxu0
        %1776 = vmatprep.mubr.bf16.mxu0 %v627
        %1777 = vmatmul.mubr.bf16.gmra.mxu0 %v626
        %v1778 = vpop.f32.mrf.mxu0
        %v1779 = vadd.f32 0.0, %v1778
        %v1780 = vpop.f32.mrf.mxu0
        %v1781 = vpop.f32.mrf.mxu0
        %v1782 = vadd.f32 0.0, %v1781
        %v1783 = vpop.f32.mrf.mxu0
        %1784 = vmatprep.mubr.bf16.mxu0 %v629
        %1785 = vmatmul.mubr.bf16.gmra.mxu0 %v628
        %v1786 = vpop.f32.mrf.mxu0
        %v1787 = vadd.f32 0.0, %v1786
        %v1788 = vpop.f32.mrf.mxu0
        %v1789 = vpop.f32.mrf.mxu0
        %v1790 = vadd.f32 0.0, %v1789
        %v1791 = vpop.f32.mrf.mxu0
        %1792 = vmatprep.mubr.bf16.mxu0 %v631
        %1793 = vmatmul.mubr.bf16.gmra.mxu0 %v630
        %v1794 = vpop.f32.mrf.mxu0
        %v1795 = vadd.f32 0.0, %v1794
        %v1796 = vpop.f32.mrf.mxu0
        %v1797 = vpop.f32.mrf.mxu0
        %v1798 = vadd.f32 0.0, %v1797
        %v1799 = vpop.f32.mrf.mxu0
        %1800 = vmatprep.mubr.bf16.mxu0 %v633
        %1801 = vmatmul.mubr.bf16.gmra.mxu0 %v632
        %v1802 = vpop.f32.mrf.mxu0
        %v1803 = vadd.f32 0.0, %v1802
        %v1804 = vpop.f32.mrf.mxu0
        %v1805 = vpop.f32.mrf.mxu0
        %v1806 = vadd.f32 0.0, %v1805
        %v1807 = vpop.f32.mrf.mxu0
        %1808 = vmatprep.mubr.bf16.mxu0 %v635
        %1809 = vmatmul.mubr.bf16.gmra.mxu0 %v634
        %v1810 = vpop.f32.mrf.mxu0
        %v1811 = vadd.f32 0.0, %v1810
        %v1812 = vpop.f32.mrf.mxu0
        %v1813 = vpop.f32.mrf.mxu0
        %v1814 = vadd.f32 0.0, %v1813
        %v1815 = vpop.f32.mrf.mxu0
        %1816 = vmatprep.mubr.bf16.mxu0 %v637
        %1817 = vmatmul.mubr.bf16.gmra.mxu0 %v636
        %v1818 = vpop.f32.mrf.mxu0
        %v1819 = vadd.f32 0.0, %v1818
        %v1820 = vpop.f32.mrf.mxu0
        %v1821 = vpop.f32.mrf.mxu0
        %v1822 = vadd.f32 0.0, %v1821
        %v1823 = vpop.f32.mrf.mxu0
        %1824 = vdwg.mxu0
        %v1825 = vpack.c.bf16 %v1702, %v1699
        %v1826 = vpack.c.bf16 %v1710, %v1707
        %v1827 = vpack.c.bf16 %v1718, %v1715
        %v1828 = vpack.c.bf16 %v1726, %v1723
        %v1829 = vpack.c.bf16 %v1734, %v1731
        %v1830 = vpack.c.bf16 %v1742, %v1739
        %v1831 = vpack.c.bf16 %v1750, %v1747
        %v1832 = vpack.c.bf16 %v1758, %v1755
        %v1833 = vpack.c.bf16 %v1766, %v1763
        %v1834 = vpack.c.bf16 %v1774, %v1771
        %v1835 = vpack.c.bf16 %v1782, %v1779
        %v1836 = vpack.c.bf16 %v1790, %v1787
        %v1837 = vpack.c.bf16 %v1798, %v1795
        %v1838 = vpack.c.bf16 %v1806, %v1803
        %v1839 = vpack.c.bf16 %v1814, %v1811
        %v1840 = vpack.c.bf16 %v1822, %v1819
        %v1857 = vunpack.c.l.b16 %v1825
        %v1858 = vunpack.c.h.b16 %v1825
        %v1859 = vunpack.c.l.b16 %v1826
        %v1860 = vunpack.c.h.b16 %v1826
        %v1861 = vunpack.c.l.b16 %v1827
        %v1862 = vunpack.c.h.b16 %v1827
        %v1863 = vunpack.c.l.b16 %v1828
        %v1864 = vunpack.c.h.b16 %v1828
        %v1865 = vunpack.c.l.b16 %v1829
        %v1866 = vunpack.c.h.b16 %v1829
        %v1867 = vunpack.c.l.b16 %v1830
        %v1868 = vunpack.c.h.b16 %v1830
        %v1869 = vunpack.c.l.b16 %v1831
        %v1870 = vunpack.c.h.b16 %v1831
        %v1871 = vunpack.c.l.b16 %v1832
        %v1872 = vunpack.c.h.b16 %v1832
        %v1873 = vunpack.c.l.b16 %v1833
        %v1874 = vunpack.c.h.b16 %v1833
        %v1875 = vunpack.c.l.b16 %v1834
        %v1876 = vunpack.c.h.b16 %v1834
        %v1877 = vunpack.c.l.b16 %v1835
        %v1878 = vunpack.c.h.b16 %v1835
        %v1879 = vunpack.c.l.b16 %v1836
        %v1880 = vunpack.c.h.b16 %v1836
        %v1881 = vunpack.c.l.b16 %v1837
        %v1882 = vunpack.c.h.b16 %v1837
        %v1883 = vunpack.c.l.b16 %v1838
        %v1884 = vunpack.c.h.b16 %v1838
        %v1885 = vunpack.c.l.b16 %v1839
        %v1886 = vunpack.c.h.b16 %v1839
        %v1887 = vunpack.c.l.b16 %v1840
        %v1888 = vunpack.c.h.b16 %v1840
        %v1889 = vpack.c.b16 %v1857, %v1857
        %v1890 = vpack.c.b16 %v1858, %v1858
        %v1891 = vpack.c.b16 %v1859, %v1859
        %v1892 = vpack.c.b16 %v1860, %v1860
        %v1893 = vpack.c.b16 %v1861, %v1861
        %v1894 = vpack.c.b16 %v1862, %v1862
        %v1895 = vpack.c.b16 %v1863, %v1863
        %v1896 = vpack.c.b16 %v1864, %v1864
        %v1897 = vpack.c.b16 %v1865, %v1865
        %v1898 = vpack.c.b16 %v1866, %v1866
        %v1899 = vpack.c.b16 %v1867, %v1867
        %v1900 = vpack.c.b16 %v1868, %v1868
        %v1901 = vpack.c.b16 %v1869, %v1869
        %v1902 = vpack.c.b16 %v1870, %v1870
        %v1903 = vpack.c.b16 %v1871, %v1871
        %v1904 = vpack.c.b16 %v1872, %v1872
        %v1905 = vpack.c.b16 %v1873, %v1873
        %v1906 = vpack.c.b16 %v1874, %v1874
        %v1907 = vpack.c.b16 %v1875, %v1875
        %v1908 = vpack.c.b16 %v1876, %v1876
        %v1909 = vpack.c.b16 %v1877, %v1877
        %v1910 = vpack.c.b16 %v1878, %v1878
        %v1911 = vpack.c.b16 %v1879, %v1879
        %v1912 = vpack.c.b16 %v1880, %v1880
        %v1913 = vpack.c.b16 %v1881, %v1881
        %v1914 = vpack.c.b16 %v1882, %v1882
        %v1915 = vpack.c.b16 %v1883, %v1883
        %v1916 = vpack.c.b16 %v1884, %v1884
        %v1917 = vpack.c.b16 %v1885, %v1885
        %v1918 = vpack.c.b16 %v1886, %v1886
        %v1919 = vpack.c.b16 %v1887, %v1887
        %v1920 = vpack.c.b16 %v1888, %v1888
        %1953 = vst [vmem:[%s440] sm:$0xf] %v1889
        %1954 = vst [vmem:[%s440 + $0x4] sm:$0xf] %v1890
        %1955 = vst [vmem:[%s440 + $0x8] sm:$0xf] %v1891
        %1956 = vst [vmem:[%s440 + $0xc] sm:$0xf] %v1892
        %1957 = vst [vmem:[%s440 + $0x10] sm:$0xf] %v1893
        %1958 = vst [vmem:[%s440 + $0x14] sm:$0xf] %v1894
        %1959 = vst [vmem:[%s440 + $0x18] sm:$0xf] %v1895
        %1960 = vst [vmem:[%s440 + $0x1c] sm:$0xf] %v1896
        %1961 = vst [vmem:[%s440 + $0x20] sm:$0xf] %v1897
        %1962 = vst [vmem:[%s440 + $0x24] sm:$0xf] %v1898
        %1963 = vst [vmem:[%s440 + $0x28] sm:$0xf] %v1899
        %1964 = vst [vmem:[%s440 + $0x2c] sm:$0xf] %v1900
        %1965 = vst [vmem:[%s440 + $0x30] sm:$0xf] %v1901
        %1966 = vst [vmem:[%s440 + $0x34] sm:$0xf] %v1902
        %1967 = vst [vmem:[%s440 + $0x38] sm:$0xf] %v1903
        %1968 = vst [vmem:[%s440 + $0x3c] sm:$0xf] %v1904
        %1969 = vst [vmem:[%s440 + $0x40] sm:$0xf] %v1905
        %1970 = vst [vmem:[%s440 + $0x44] sm:$0xf] %v1906
        %1971 = vst [vmem:[%s440 + $0x48] sm:$0xf] %v1907
        %1972 = vst [vmem:[%s440 + $0x4c] sm:$0xf] %v1908
        %1973 = vst [vmem:[%s440 + $0x50] sm:$0xf] %v1909
        %1974 = vst [vmem:[%s440 + $0x54] sm:$0xf] %v1910
        %1975 = vst [vmem:[%s440 + $0x58] sm:$0xf] %v1911
        %1976 = vst [vmem:[%s440 + $0x5c] sm:$0xf] %v1912
        %1977 = vst [vmem:[%s440 + $0x60] sm:$0xf] %v1913
        %1978 = vst [vmem:[%s440 + $0x64] sm:$0xf] %v1914
        %1979 = vst [vmem:[%s440 + $0x68] sm:$0xf] %v1915
        %1980 = vst [vmem:[%s440 + $0x6c] sm:$0xf] %v1916
        %1981 = vst [vmem:[%s440 + $0x70] sm:$0xf] %v1917
        %1982 = vst [vmem:[%s440 + $0x74] sm:$0xf] %v1918
        %1983 = vst [vmem:[%s440 + $0x78] sm:$0xf] %v1919
        %1984 = vst [vmem:[%s440 + $0x7c] sm:$0xf] %v1920
        %s1985 = sand.u32 %s170, 1
        %s1986 = scalar_lea.sflag [#allocation4], %s1985
        %s1987 = sand.u32 %s170, 1
        %s1988 = smul.addr %s1987, 128
        %s1989 = scalar_lea.vmem [#allocation10], %s1988
        %s1990 = sand.u32 %s33, 1
        %s1991 = scalar_lea.sflag [#allocation12], %s1990
        %s1992 = sand.u32 %s200, 1
        %s1993 = smul.addr %s1992, 128
        %s1994 = scalar_lea.vmem [#allocation11], %s1993
        %s1995 = sand.u32 %s33, 1
        %s1996 = scalar_lea.sflag [#allocation12], %s1995
        %s1997 = sand.u32 %s230, 1
        %s1998 = smul.addr %s1997, 128
        %s1999 = scalar_lea.vmem [#allocation13], %s1998
        // Predicated region
        $region53: #{tpu_custom_call.1} parent=35 // pred_check
          %p2000 = pneg %p180
        $region54: #{tpu_custom_call.1} parent=35 // pred_check_branch
          %2002 = sbr.rel (%p2000) target = $region56
        $region55: #{tpu_custom_call.1} parent=35 // pred_region
          %s2003 = smul.u32 32, %s39
          %s2005 = ssub.s32 2048, 2048
          %2006 = vsyncadd %s1986, %s2005
          %s2007 = smul.addr %s40, 64
          %s2008 = sadd.s32 %s2003, %s2007
          %s2009 = smul.addr %s38, 128
          %s2010 = sadd.s32 %s2008, %s2009
          %s2011 = smul.addr %s2010, 64
          %s2012 = scalar_lea.hbm %s4, %s2011
          %s2013 = sshll.u32 %s1989, 4
          %s2014 = int_to_ptr.vmem [resolvable:$true] %s2013
          %2019 = dma.vmem_to_hbm [thread:$0]  %s2014, 2048, %s2012, %s1986, 64, 64, 4
        $region56: #{tpu_custom_call.1} parent=35 // pred_fallthru
          _
        // Predicated region
        $region57: #{tpu_custom_call.1} parent=35 // pred_check
          %p2020 = pneg %p210
        $region58: #{tpu_custom_call.1} parent=35 // pred_check_branch
          %2022 = sbr.rel (%p2020) target = $region60
        $region59: #{tpu_custom_call.1} parent=35 // pred_region
          %s2023 = smul.u32 32, %s39
          %s2025 = ssub.s32 2048, 2048
          %2026 = vsyncadd %s1991, %s2025
          %s2027 = smul.addr %s40, 64
          %s2028 = sadd.s32 %s2023, %s2027
          %s2029 = smul.addr %s38, 128
          %s2030 = sadd.s32 %s2028, %s2029
          %s2031 = smul.addr %s2030, 64
          %s2032 = scalar_lea.hbm %s5, %s2031
          %s2033 = sshll.u32 %s1994, 4
          %s2034 = int_to_ptr.vmem [resolvable:$true] %s2033
          %2039 = dma.vmem_to_hbm [thread:$0]  %s2034, 2048, %s2032, %s1991, 64, 64, 4
        $region60: #{tpu_custom_call.1} parent=35 // pred_fallthru
          _
        // Predicated region
        $region61: #{tpu_custom_call.1} parent=35 // pred_check
          %p2040 = pneg %p240
        $region62: #{tpu_custom_call.1} parent=35 // pred_check_branch
          %2042 = sbr.rel (%p2040) target = $region64
        $region63: #{tpu_custom_call.1} parent=35 // pred_region
          %s2043 = smul.u32 32, %s39
          %s2045 = ssub.s32 2048, 2048
          %2046 = vsyncadd %s1996, %s2045
          %s2047 = smul.addr %s40, 64
          %s2048 = sadd.s32 %s2043, %s2047
          %s2049 = smul.addr %s38, 128
          %s2050 = sadd.s32 %s2048, %s2049
          %s2051 = smul.addr %s2050, 64
          %s2052 = scalar_lea.hbm %s6, %s2051
          %s2053 = sshll.u32 %s1999, 4
          %s2054 = int_to_ptr.vmem [resolvable:$true] %s2053
          %2059 = dma.vmem_to_hbm [thread:$0]  %s2054, 2048, %s2052, %s1996, 64, 64, 4
        $region64: #{tpu_custom_call.1} parent=35 // pred_fallthru
          _
      $region36: #{tpu_custom_call.1} parent=5 // pred_fallthru
        _
      %p2060 = scmp.le.s32.totalorder 2, %s28
      // Predicated region
      $region65: #{tpu_custom_call.1} parent=5 // pred_check
        %p2061 = pneg %p2060
      $region66: #{tpu_custom_call.1} parent=5 // pred_check_branch
        %2063 = sbr.rel (%p2061) target = $region68
      $region67: #{tpu_custom_call.1} parent=5 // pred_region
        %s2064 = ssub.s32 %s28, 2
        // Predicated region
        $region69: #{tpu_custom_call.1} parent=67 // pred_check
          %p2065 = pneg %p186
        $region70: #{tpu_custom_call.1} parent=67 // pred_check_branch
          %2067 = sbr.rel (%p2065) target = $region72
        $region71: #{tpu_custom_call.1} parent=67 // pred_region
          %s2068 = sand.u32 %s171, 1
          %s2069 = scalar_lea.sflag [#allocation4], %s2068
          %s2070 = sand.u32 %s171, 1
          %s2071 = smul.addr %s2070, 128
          %s2072 = scalar_lea.vmem [#allocation10], %s2071
          %2073 = dma.done %s2069, 2048
        $region72: #{tpu_custom_call.1} parent=67 // pred_fallthru
          _
        // Predicated region
        $region73: #{tpu_custom_call.1} parent=67 // pred_check
          %p2074 = pneg %p216
        $region74: #{tpu_custom_call.1} parent=67 // pred_check_branch
          %2076 = sbr.rel (%p2074) target = $region76
        $region75: #{tpu_custom_call.1} parent=67 // pred_region
          %s2077 = sand.u32 %s34, 1
          %s2078 = scalar_lea.sflag [#allocation12], %s2077
          %s2079 = sand.u32 %s201, 1
          %s2080 = smul.addr %s2079, 128
          %s2081 = scalar_lea.vmem [#allocation11], %s2080
          %2082 = dma.done %s2078, 2048
        $region76: #{tpu_custom_call.1} parent=67 // pred_fallthru
          _
        // Predicated region
        $region77: #{tpu_custom_call.1} parent=67 // pred_check
          %p2083 = pneg %p246
        $region78: #{tpu_custom_call.1} parent=67 // pred_check_branch
          %2085 = sbr.rel (%p2083) target = $region80
        $region79: #{tpu_custom_call.1} parent=67 // pred_region
          %s2086 = sand.u32 %s34, 1
          %s2087 = scalar_lea.sflag [#allocation12], %s2086
          %s2088 = sand.u32 %s231, 1
          %s2089 = smul.addr %s2088, 128
          %s2090 = scalar_lea.vmem [#allocation13], %s2089
          %2091 = dma.done %s2087, 2048
        $region80: #{tpu_custom_call.1} parent=67 // pred_fallthru
          _
      $region68: #{tpu_custom_call.1} parent=5 // pred_fallthru
        _
    $region6: #{tpu_custom_call.1} parent=1 // loop_footer
      %s32 = sadd.s32 1, %s28
    $region7: #{tpu_custom_call.1} parent=1 // loop_footer_branch
      %27 = sbr.rel target = $region3
    $region8: #{tpu_custom_call.1} parent=1 // loop_exit
      _
    %2092 = vsyncpa [#allocation3], 1
    %s2093 = scalar_lea.sflag [#allocation3], 1
    %2094 = vsyncpa %s2093, 1
    %2095 = vsyncpa [#allocation6], 1
    %s2096 = scalar_lea.sflag [#allocation6], 1
    %2097 = vsyncpa %s2096, 1
    %2098 = vsyncpa [#allocation9], 1
    %s2099 = scalar_lea.sflag [#allocation9], 1
    %2100 = vsyncpa %s2099, 1
    %2101 = vsyncpa [#allocation4], 1
    %s2102 = scalar_lea.sflag [#allocation4], 1
    %2103 = vsyncpa %s2102, 1
    %2104 = vsyncpa [#allocation12], 1
    %s2105 = scalar_lea.sflag [#allocation12], 1
    %2106 = vsyncpa %s2105, 1

</llo_original>
